<compile_context>
chip_gen: v6e
topology: v6e:2x2x1
jax: 0.10.0
libtpu: 0.0.40
codegen_flags: <defaults>
</compile_context>

<pallas_src>
import functools

import jax
import jax.numpy as jnp
from jax import lax
from jax.experimental import pallas as pl
from jax.experimental.pallas import tpu as pltpu

# VAT hyper-parameters (from VAT.__init__)
N_POWER = 1          # analytic-gradient fusion below assumes n_power == 1
XI = 0.01
EPSILON = 1.0

_NEG = -1e9                       # padded-class bias: -inf under f32 softmax
_W_RESIDENT_BYTES = 16 * 1024 * 1024


def _round_up(v, m):
    return ((v + m - 1) // m) * m


def _log_softmax(z):
    m = jnp.max(z, axis=1, keepdims=True)
    s = z - m
    return s - jnp.log(jnp.sum(jnp.exp(s), axis=1, keepdims=True))


# ----------------------------- Pallas kernel -----------------------------

def _vat_kernel(x_ref, d_ref, w_ref, b_ref, kl_ref,
                acc_l, acc_p, acc_ss, acc_g,
                *, xi, eps, batch, kt, w_resident):
    """Fully fused VAT loss.

    grid = (batch tiles, K tiles over F); K is a reduction ("arbitrary") axis.
      logit = x @ W + b
      p1    = logit + (XI / (||d|| + 1e-8)) * (d @ W)          # model(x + XI*norm(d))
      g     = (softmax(p1) - softmax(logit)) / B               # exact dKL/dp_logit
      G     = W^T W  (accumulated over the same K loop)
      gG    = g @ G  == grad_d @ W,   ||grad_d||^2 = rowsum(gG * g)
      p2    = logit + (eps / (||grad_d|| + 1e-8)) * gG         # model(x + r_vadv)
      kl    = sum_c softmax(logit) * (log_softmax(logit) - log_softmax(p2))
    """
    k = pl.program_id(1)

    @pl.when(k == 0)
    def _():
        acc_l[...] = jnp.zeros_like(acc_l)
        acc_p[...] = jnp.zeros_like(acc_p)
        acc_ss[...] = jnp.zeros_like(acc_ss)
        acc_g[...] = jnp.zeros_like(acc_g)

    x = x_ref[...]
    d = d_ref[...]
    if w_resident:
        off = pl.multiple_of(k * kt, kt)
        w = w_ref[pl.ds(off, kt), :]          # W stays VMEM-resident; slice the K tile
    else:
        w = w_ref[...]                        # streamed (kt, CP) tile

    acc_l[...] += jnp.dot(x, w, preferred_element_type=jnp.float32)
    acc_p[...] += jnp.dot(d, w, preferred_element_type=jnp.float32)
    acc_ss[...] += jnp.sum(d * d, axis=1, keepdims=True)
    # G += w^T @ w  (contract the K axis of both operands)
    acc_g[...] += lax.dot_general(w, w,
                                  dimension_numbers=(((0,), (0,)), ((), ())),
                                  preferred_element_type=jnp.float32)

    @pl.when(k == pl.num_programs(1) - 1)
    def _():
        logit = acc_l[...] + b_ref[...]
        log_q = _log_softmax(logit)
        q = jnp.exp(log_q)

        # XI-normalized perturbed logits (get_normalized_vector fused as a row scale)
        scale1 = xi / (jnp.sqrt(acc_ss[...]) + 1e-8)
        p1 = logit + scale1 * acc_p[...]
        p = jnp.exp(_log_softmax(p1))
        g = (p - q) / batch                   # exact dKL/dp_logit for the linear model

        # backward + eps-normalized second forward via the Gram matrix
        gG = jnp.dot(g, acc_g[...], preferred_element_type=jnp.float32)   # grad_d @ W
        ss2 = jnp.maximum(jnp.sum(gG * g, axis=1, keepdims=True), 0.0)    # ||grad_d||^2
        scale2 = eps / (jnp.sqrt(ss2) + 1e-8)
        p2 = logit + scale2 * gG

        log_p2 = _log_softmax(p2)
        kl_row = jnp.sum(q * (log_q - log_p2), axis=1, keepdims=True)     # (bt, 1)
        kl_ref[...] = jnp.broadcast_to(kl_row, kl_ref.shape)              # lane-dense store


# ----------------------------- wrapper -----------------------------

def _choose_bt(batch):
    if batch < 16:
        return _round_up(max(batch, 1), 8)
    # split the batch into >= 2 tiles (v7x megacore), multiples of 8, capped at 256
    bt = min(256, ((batch // 2) // 8) * 8)
    return max(bt, 8)


def _choose_kt(feat_padded):
    # feat_padded is a multiple of 128
    if feat_padded <= 2048:
        return feat_padded
    for cand in (2048, 1024, 512, 256, 128):
        if feat_padded % cand == 0:
            return cand
    return 128


def vat_forward(x, w, b, d_init, *, xi=XI, eps=EPSILON, n_power=N_POWER):
    """Virtual adversarial loss (VAT.forward) for the synthetic linear model."""
    assert n_power == 1, "analytic-gradient fusion assumes n_power == 1"
    B = x.shape[0]
    x_flat = x.reshape(B, -1).astype(jnp.float32)
    d_flat = d_init.reshape(B, -1).astype(jnp.float32)    # torch.randn_like(x)
    F = x_flat.shape[1]
    C = w.shape[1]
    CP = _round_up(C, 128)                                 # lane-dense class dim

    bt = _choose_bt(B)
    BP = _round_up(B, bt)
    FP = _round_up(F, 128)
    kt = _choose_kt(FP)
    nb, nk = BP // bt, FP // kt

    # zero padding: padded rows give exactly 0 KL; padded F columns contribute nothing
    x_p = jnp.pad(x_flat, ((0, BP - B), (0, FP - F)))
    d_p = jnp.pad(d_flat, ((0, BP - B), (0, FP - F)))
    w_pad = jnp.pad(w.astype(jnp.float32), ((0, FP - F), (0, CP - C)))
    b_pad = jnp.pad(b.astype(jnp.float32).reshape(1, C),
                    ((0, 0), (0, CP - C)), constant_values=_NEG)

    w_resident = FP * CP * 4 <= _W_RESIDENT_BYTES
    if w_resident:
        w_spec = pl.BlockSpec((FP, CP), lambda i, k: (0, 0))   # never re-DMA'd
    else:
        w_spec = pl.BlockSpec((kt, CP), lambda i, k: (k, 0))   # streamed per K step

    kernel = functools.partial(_vat_kernel, xi=float(xi), eps=float(eps),
                               batch=float(B), kt=kt, w_resident=w_resident)

    kl = pl.pallas_call(
        kernel,
        out_shape=jax.ShapeDtypeStruct((BP, 128), jnp.float32),
        grid=(nb, nk),
        in_specs=[pl.BlockSpec((bt, kt), lambda i, k: (i, k)),
                  pl.BlockSpec((bt, kt), lambda i, k: (i, k)),
                  w_spec,
                  pl.BlockSpec((1, CP), lambda i, k: (0, 0))],
        out_specs=pl.BlockSpec((bt, 128), lambda i, k: (i, 0)),
        scratch_shapes=[pltpu.VMEM((bt, CP), jnp.float32),   # acc_l
                        pltpu.VMEM((bt, CP), jnp.float32),   # acc_p
                        pltpu.VMEM((bt, 1), jnp.float32),    # acc ||d||^2
                        pltpu.VMEM((CP, CP), jnp.float32)],  # acc G = W^T W
        compiler_params=pltpu.CompilerParams(
            dimension_semantics=("parallel", "arbitrary"),
            vmem_limit_bytes=48 * 1024 * 1024),               # fits v7x's 64 MiB VMEM
    )(x_p, d_p, w_pad, b_pad)

    return jnp.mean(kl[:B, 0])   # mean over the real batch rows


# ----------------------- reference (pure jnp + jax.grad) -----------------------

def _ref_kl(q_logit, p_logit):
    q = jax.nn.softmax(q_logit, axis=1)
    return jnp.mean(jnp.sum(q * (jax.nn.log_softmax(q_logit, axis=1)
                                 - jax.nn.log_softmax(p_logit, axis=1)), axis=1))


def vat_forward_ref(x, w, b, d_init, *, xi=XI, eps=EPSILON):
    B = x.shape[0]
    x_flat = x.reshape(B, -1).astype(jnp.float32)
    d = d_init.reshape(B, -1).astype(jnp.float32)

    def norm_scale(v, s):
        n = jnp.sqrt(jnp.sum(v * v, axis=1, keepdims=True))
        return s * v / (n + 1e-8)

    model = lambda xf: xf @ w + b
    d1 = norm_scale(d, xi)
    dist_fn = lambda dd: _ref_kl(model(x_flat), model(x_flat + dd))
    grad = jax.grad(dist_fn)(d1)
    r = norm_scale(grad, eps)
    return _ref_kl(model(x_flat), model(x_flat + r))


# ----------------------------- main -----------------------------

if __name__ == "__main__":
    key = jax.random.PRNGKey(0)
    k_x, k_w, k_d = jax.random.split(key, 3)

    B, C_in, H, W_sp = 2, 4, 16, 16
    F = C_in * H * W_sp
    num_classes = 8

    x = jax.random.normal(k_x, (B, C_in, H, W_sp), dtype=jnp.float32)
    w = 0.02 * jax.random.normal(k_w, (F, num_classes), dtype=jnp.float32)
    b = jnp.zeros((1, num_classes), dtype=jnp.float32)
    d_init = jax.random.normal(k_d, (B, C_in, H, W_sp), dtype=jnp.float32)

    loss = jax.block_until_ready(jax.jit(vat_forward)(x, w, b, d_init))
    loss_ref = jax.block_until_ready(vat_forward_ref(x, w, b, d_init))
    assert abs(float(loss) - float(loss_ref)) < 1e-5 + 1e-4 * abs(float(loss_ref)), (
        loss, loss_ref)

    print("KERNEL_OK")
</pallas_src>

<mosaic_0001>
module attributes {stable_mosaic.version = 11 : i64} {
  func.func @_vat_kernel(%arg0: i32, %arg1: i32, %arg2: memref<8x1024xf32, #tpu.memory_space<vmem>>, %arg3: memref<8x1024xf32, #tpu.memory_space<vmem>>, %arg4: memref<1024x128xf32, #tpu.memory_space<vmem>>, %arg5: memref<1x128xf32, #tpu.memory_space<vmem>>, %arg6: memref<8x128xf32, #tpu.memory_space<vmem>>, %arg7: memref<8x128xf32, #tpu.memory_space<vmem>>, %arg8: memref<8x128xf32, #tpu.memory_space<vmem>>, %arg9: memref<8x1xf32, #tpu.memory_space<vmem>>, %arg10: memref<128x128xf32, #tpu.memory_space<vmem>>) attributes {dimension_semantics = [#tpu.dimension_semantics<parallel>, #tpu.dimension_semantics<arbitrary>], iteration_bounds = array<i64: 1, 1>, scalar_prefetch = 0 : i64, scratch_operands = 4 : i64, tpu.core_type = #tpu.core_type<tc>, window_params = [{transform_indices = @transform_0, window_bounds = array<i64: 8, 1024>}, {transform_indices = @transform_1, window_bounds = array<i64: 8, 1024>}, {pipeline_mode = #tpu.pipeline_mode<synchronous>, transform_indices = @transform_2, window_bounds = array<i64: 1024, 128>}, {pipeline_mode = #tpu.pipeline_mode<synchronous>, transform_indices = @transform_3, window_bounds = array<i64: 1, 128>}, {transform_indices = @transform_4, window_bounds = array<i64: 8, 128>}]} {
    %c0_i32 = arith.constant 0 : i32
    %0 = arith.cmpi eq, %arg1, %c0_i32 : i32
    %1 = arith.extui %0 : i1 to i32
    %c0_i32_0 = arith.constant 0 : i32
    %2 = arith.cmpi ne, %1, %c0_i32_0 : i32
    scf.if %2 {
      %cst_26 = arith.constant 0.000000e+00 : f32
      %30 = vector.broadcast %cst_26 : f32 to vector<8x128xf32>
      %c0_27 = arith.constant 0 : index
      %c0_28 = arith.constant 0 : index
      %31 = vector.load %arg7[%c0_27, %c0_28] : memref<8x128xf32, #tpu.memory_space<vmem>>, vector<8x128xf32>
      tpu.vector_store %arg7[%c0_27, %c0_28], %30 {strides = array<i32>} : memref<8x128xf32, #tpu.memory_space<vmem>>, vector<8x128xf32>,
      %cst_29 = arith.constant 0.000000e+00 : f32
      %32 = vector.broadcast %cst_29 : f32 to vector<8x128xf32>
      %c0_30 = arith.constant 0 : index
      %c0_31 = arith.constant 0 : index
      %33 = vector.load %arg8[%c0_30, %c0_31] : memref<8x128xf32, #tpu.memory_space<vmem>>, vector<8x128xf32>
      tpu.vector_store %arg8[%c0_30, %c0_31], %32 {strides = array<i32>} : memref<8x128xf32, #tpu.memory_space<vmem>>, vector<8x128xf32>,
      %cst_32 = arith.constant 0.000000e+00 : f32
      %34 = vector.broadcast %cst_32 : f32 to vector<8x1xf32>
      %c0_33 = arith.constant 0 : index
      %c0_34 = arith.constant 0 : index
      %35 = vector.load %arg9[%c0_33, %c0_34] : memref<8x1xf32, #tpu.memory_space<vmem>>, vector<8x1xf32>
      tpu.vector_store %arg9[%c0_33, %c0_34], %34 {strides = array<i32>} : memref<8x1xf32, #tpu.memory_space<vmem>>, vector<8x1xf32>,
      %cst_35 = arith.constant 0.000000e+00 : f32
      %36 = vector.broadcast %cst_35 : f32 to vector<128x128xf32>
      %c0_36 = arith.constant 0 : index
      %c0_37 = arith.constant 0 : index
      %37 = vector.load %arg10[%c0_36, %c0_37] : memref<128x128xf32, #tpu.memory_space<vmem>>, vector<128x128xf32>
      tpu.vector_store %arg10[%c0_36, %c0_37], %36 {strides = array<i32>} : memref<128x128xf32, #tpu.memory_space<vmem>>, vector<128x128xf32>,
    } else {
    }
    %c0 = arith.constant 0 : index
    %c0_1 = arith.constant 0 : index
    %3 = vector.load %arg2[%c0, %c0_1] : memref<8x1024xf32, #tpu.memory_space<vmem>>, vector<8x1024xf32>
    %c0_2 = arith.constant 0 : index
    %c0_3 = arith.constant 0 : index
    %4 = vector.load %arg3[%c0_2, %c0_3] : memref<8x1024xf32, #tpu.memory_space<vmem>>, vector<8x1024xf32>
    %c1024_i32 = arith.constant 1024 : i32
    %5 = arith.muli %arg1, %c1024_i32 : i32
    %6 = tpu.assume_multiple %5, 1024 : i32
    %7 = arith.index_cast %6 : i32 to index
    %c0_4 = arith.constant 0 : index
    %8 = vector.load %arg4[%7, %c0_4] : memref<1024x128xf32, #tpu.memory_space<vmem>>, vector<1024x128xf32>
    %c0_5 = arith.constant 0 : index
    %c0_6 = arith.constant 0 : index
    %9 = vector.load %arg7[%c0_5, %c0_6] : memref<8x128xf32, #tpu.memory_space<vmem>>, vector<8x128xf32>
    %cst = arith.constant dense<0.000000e+00> : vector<8x128xf32>
    %10 = tpu.matmul %3, %8, %cst {dimension_numbers = #tpu.dot_dimension_numbers<[1], [0], [0], [1], [0, 0, 1, 1], [], []>} : vector<8x1024xf32>, vector<1024x128xf32>, vector<8x128xf32> -> vector<8x128xf32>
    %11 = arith.addf %9, %10 : vector<8x128xf32>
    %c0_7 = arith.constant 0 : index
    %c0_8 = arith.constant 0 : index
    %12 = vector.load %arg7[%c0_7, %c0_8] : memref<8x128xf32, #tpu.memory_space<vmem>>, vector<8x128xf32>
    tpu.vector_store %arg7[%c0_7, %c0_8], %11 {strides = array<i32>} : memref<8x128xf32, #tpu.memory_space<vmem>>, vector<8x128xf32>,
    %c0_9 = arith.constant 0 : index
    %c0_10 = arith.constant 0 : index
    %13 = vector.load %arg8[%c0_9, %c0_10] : memref<8x128xf32, #tpu.memory_space<vmem>>, vector<8x128xf32>
    %cst_11 = arith.constant dense<0.000000e+00> : vector<8x128xf32>
    %14 = tpu.matmul %4, %8, %cst_11 {dimension_numbers = #tpu.dot_dimension_numbers<[1], [0], [0], [1], [0, 0, 1, 1], [], []>} : vector<8x1024xf32>, vector<1024x128xf32>, vector<8x128xf32> -> vector<8x128xf32>
    %15 = arith.addf %13, %14 : vector<8x128xf32>
    %c0_12 = arith.constant 0 : index
    %c0_13 = arith.constant 0 : index
    %16 = vector.load %arg8[%c0_12, %c0_13] : memref<8x128xf32, #tpu.memory_space<vmem>>, vector<8x128xf32>
    tpu.vector_store %arg8[%c0_12, %c0_13], %15 {strides = array<i32>} : memref<8x128xf32, #tpu.memory_space<vmem>>, vector<8x128xf32>,
    %c0_14 = arith.constant 0 : index
    %c0_15 = arith.constant 0 : index
    %17 = vector.load %arg9[%c0_14, %c0_15] : memref<8x1xf32, #tpu.memory_space<vmem>>, vector<8x1xf32>
    %18 = arith.mulf %4, %4 : vector<8x1024xf32>
    %cst_16 = arith.constant dense<0.000000e+00> : vector<8xf32>
    %19 = vector.multi_reduction <add>, %18, %cst_16 [1] : vector<8x1024xf32> to vector<8xf32>
    %20 = vector.shape_cast %19 : vector<8xf32> to vector<8x1xf32>
    %21 = arith.addf %17, %20 : vector<8x1xf32>
    %c0_17 = arith.constant 0 : index
    %c0_18 = arith.constant 0 : index
    %22 = vector.load %arg9[%c0_17, %c0_18] : memref<8x1xf32, #tpu.memory_space<vmem>>, vector<8x1xf32>
    tpu.vector_store %arg9[%c0_17, %c0_18], %21 {strides = array<i32>} : memref<8x1xf32, #tpu.memory_space<vmem>>, vector<8x1xf32>,
    %c0_19 = arith.constant 0 : index
    %c0_20 = arith.constant 0 : index
    %23 = vector.load %arg10[%c0_19, %c0_20] : memref<128x128xf32, #tpu.memory_space<vmem>>, vector<128x128xf32>
    %cst_21 = arith.constant dense<0.000000e+00> : vector<128x128xf32>
    %24 = tpu.matmul %8, %8, %cst_21 {dimension_numbers = #tpu.dot_dimension_numbers<[0], [0], [1], [1], [0, 1, 1, 1], [], []>} : vector<1024x128xf32>, vector<1024x128xf32>, vector<128x128xf32> -> vector<128x128xf32>
    %25 = arith.addf %23, %24 : vector<128x128xf32>
    %c0_22 = arith.constant 0 : index
    %c0_23 = arith.constant 0 : index
    %26 = vector.load %arg10[%c0_22, %c0_23] : memref<128x128xf32, #tpu.memory_space<vmem>>, vector<128x128xf32>
    tpu.vector_store %arg10[%c0_22, %c0_23], %25 {strides = array<i32>} : memref<128x128xf32, #tpu.memory_space<vmem>>, vector<128x128xf32>,
    %c0_i32_24 = arith.constant 0 : i32
    %27 = arith.cmpi eq, %arg1, %c0_i32_24 : i32
    %28 = arith.extui %27 : i1 to i32
    %c0_i32_25 = arith.constant 0 : i32
    %29 = arith.cmpi ne, %28, %c0_i32_25 : i32
    scf.if %29 {
      %c0_26 = arith.constant 0 : index
      %c0_27 = arith.constant 0 : index
      %30 = vector.load %arg7[%c0_26, %c0_27] : memref<8x128xf32, #tpu.memory_space<vmem>>, vector<8x128xf32>
      %c0_28 = arith.constant 0 : index
      %c0_29 = arith.constant 0 : index
      %31 = vector.load %arg5[%c0_28, %c0_29] : memref<1x128xf32, #tpu.memory_space<vmem>>, vector<1x128xf32>
      %32 = vector.broadcast %31 : vector<1x128xf32> to vector<8x128xf32>
      %33 = arith.addf %30, %32 : vector<8x128xf32>
      %cst_30 = arith.constant dense<0xFF800000> : vector<8xf32>
      %34 = vector.multi_reduction <maximumf>, %33, %cst_30 [1] : vector<8x128xf32> to vector<8xf32>
      %35 = vector.shape_cast %34 : vector<8xf32> to vector<8x1xf32>
      %36 = vector.broadcast %35 : vector<8x1xf32> to vector<8x128xf32>
      %37 = arith.subf %33, %36 : vector<8x128xf32>
      %38 = math.exp %37 : vector<8x128xf32>
      %cst_31 = arith.constant dense<0.000000e+00> : vector<8xf32>
      %39 = vector.multi_reduction <add>, %38, %cst_31 [1] : vector<8x128xf32> to vector<8xf32>
      %40 = vector.shape_cast %39 : vector<8xf32> to vector<8x1xf32>
      %41 = math.log %40 : vector<8x1xf32>
      %42 = vector.broadcast %41 : vector<8x1xf32> to vector<8x128xf32>
      %43 = arith.subf %37, %42 : vector<8x128xf32>
      %44 = math.exp %43 : vector<8x128xf32>
      %c0_32 = arith.constant 0 : index
      %c0_33 = arith.constant 0 : index
      %45 = vector.load %arg9[%c0_32, %c0_33] : memref<8x1xf32, #tpu.memory_space<vmem>>, vector<8x1xf32>
      %46 = math.sqrt %45 : vector<8x1xf32>
      %cst_34 = arith.constant 9.99999993E-9 : f32
      %47 = vector.broadcast %cst_34 : f32 to vector<8x1xf32>
      %48 = arith.addf %46, %47 : vector<8x1xf32>
      %cst_35 = arith.constant 0.00999999977 : f32
      %49 = vector.broadcast %cst_35 : f32 to vector<8x1xf32>
      %50 = arith.divf %49, %48 : vector<8x1xf32>
      %c0_36 = arith.constant 0 : index
      %c0_37 = arith.constant 0 : index
      %51 = vector.load %arg8[%c0_36, %c0_37] : memref<8x128xf32, #tpu.memory_space<vmem>>, vector<8x128xf32>
      %52 = vector.broadcast %50 : vector<8x1xf32> to vector<8x128xf32>
      %53 = arith.mulf %52, %51 : vector<8x128xf32>
      %54 = arith.addf %33, %53 : vector<8x128xf32>
      %cst_38 = arith.constant dense<0xFF800000> : vector<8xf32>
      %55 = vector.multi_reduction <maximumf>, %54, %cst_38 [1] : vector<8x128xf32> to vector<8xf32>
      %56 = vector.shape_cast %55 : vector<8xf32> to vector<8x1xf32>
      %57 = vector.broadcast %56 : vector<8x1xf32> to vector<8x128xf32>
      %58 = arith.subf %54, %57 : vector<8x128xf32>
      %59 = math.exp %58 : vector<8x128xf32>
      %cst_39 = arith.constant dense<0.000000e+00> : vector<8xf32>
      %60 = vector.multi_reduction <add>, %59, %cst_39 [1] : vector<8x128xf32> to vector<8xf32>
      %61 = vector.shape_cast %60 : vector<8xf32> to vector<8x1xf32>
      %62 = math.log %61 : vector<8x1xf32>
      %63 = vector.broadcast %62 : vector<8x1xf32> to vector<8x128xf32>
      %64 = arith.subf %58, %63 : vector<8x128xf32>
      %65 = math.exp %64 : vector<8x128xf32>
      %66 = arith.subf %65, %44 : vector<8x128xf32>
      %cst_40 = arith.constant 2.000000e+00 : f32
      %67 = vector.broadcast %cst_40 : f32 to vector<8x128xf32>
      %68 = arith.divf %66, %67 : vector<8x128xf32>
      %c0_41 = arith.constant 0 : index
      %c0_42 = arith.constant 0 : index
      %69 = vector.load %arg10[%c0_41, %c0_42] : memref<128x128xf32, #tpu.memory_space<vmem>>, vector<128x128xf32>
      %cst_43 = arith.constant dense<0.000000e+00> : vector<8x128xf32>
      %70 = tpu.matmul %68, %69, %cst_43 {dimension_numbers = #tpu.dot_dimension_numbers<[1], [0], [0], [1], [0, 0, 1, 1], [], []>} : vector<8x128xf32>, vector<128x128xf32>, vector<8x128xf32> -> vector<8x128xf32>
      %71 = arith.mulf %70, %68 : vector<8x128xf32>
      %cst_44 = arith.constant dense<0.000000e+00> : vector<8xf32>
      %72 = vector.multi_reduction <add>, %71, %cst_44 [1] : vector<8x128xf32> to vector<8xf32>
      %73 = vector.shape_cast %72 : vector<8xf32> to vector<8x1xf32>
      %cst_45 = arith.constant 0.000000e+00 : f32
      %74 = vector.broadcast %cst_45 : f32 to vector<8x1xf32>
      %75 = arith.maximumf %73, %74 : vector<8x1xf32>
      %76 = math.sqrt %75 : vector<8x1xf32>
      %cst_46 = arith.constant 9.99999993E-9 : f32
      %77 = vector.broadcast %cst_46 : f32 to vector<8x1xf32>
      %78 = arith.addf %76, %77 : vector<8x1xf32>
      %cst_47 = arith.constant 1.000000e+00 : f32
      %79 = vector.broadcast %cst_47 : f32 to vector<8x1xf32>
      %80 = arith.divf %79, %78 : vector<8x1xf32>
      %81 = vector.broadcast %80 : vector<8x1xf32> to vector<8x128xf32>
      %82 = arith.mulf %81, %70 : vector<8x128xf32>
      %83 = arith.addf %33, %82 : vector<8x128xf32>
      %cst_48 = arith.constant dense<0xFF800000> : vector<8xf32>
      %84 = vector.multi_reduction <maximumf>, %83, %cst_48 [1] : vector<8x128xf32> to vector<8xf32>
      %85 = vector.shape_cast %84 : vector<8xf32> to vector<8x1xf32>
      %86 = vector.broadcast %85 : vector<8x1xf32> to vector<8x128xf32>
      %87 = arith.subf %83, %86 : vector<8x128xf32>
      %88 = math.exp %87 : vector<8x128xf32>
      %cst_49 = arith.constant dense<0.000000e+00> : vector<8xf32>
      %89 = vector.multi_reduction <add>, %88, %cst_49 [1] : vector<8x128xf32> to vector<8xf32>
      %90 = vector.shape_cast %89 : vector<8xf32> to vector<8x1xf32>
      %91 = math.log %90 : vector<8x1xf32>
      %92 = vector.broadcast %91 : vector<8x1xf32> to vector<8x128xf32>
      %93 = arith.subf %87, %92 : vector<8x128xf32>
      %94 = arith.subf %43, %93 : vector<8x128xf32>
      %95 = arith.mulf %44, %94 : vector<8x128xf32>
      %cst_50 = arith.constant dense<0.000000e+00> : vector<8xf32>
      %96 = vector.multi_reduction <add>, %95, %cst_50 [1] : vector<8x128xf32> to vector<8xf32>
      %97 = vector.shape_cast %96 : vector<8xf32> to vector<8x1xf32>
      %98 = vector.shape_cast %97 : vector<8x1xf32> to vector<8x1xf32>
      %99 = vector.broadcast %98 : vector<8x1xf32> to vector<8x128xf32>
      %c0_51 = arith.constant 0 : index
      %c0_52 = arith.constant 0 : index
      %100 = vector.load %arg6[%c0_51, %c0_52] : memref<8x128xf32, #tpu.memory_space<vmem>>, vector<8x128xf32>
      tpu.vector_store %arg6[%c0_51, %c0_52], %99 {strides = array<i32>} : memref<8x128xf32, #tpu.memory_space<vmem>>, vector<8x128xf32>,
    } else {
    }
    return
  }
  func.func @transform_0(%arg0: i32, %arg1: i32) -> (i32, i32) {
    %c0_i32 = arith.constant 0 : i32
    return %arg0, %arg1 : i32, i32
  }
  func.func @transform_1(%arg0: i32, %arg1: i32) -> (i32, i32) {
    %c0_i32 = arith.constant 0 : i32
    return %arg0, %arg1 : i32, i32
  }
  func.func @transform_2(%arg0: i32, %arg1: i32) -> (i32, i32) {
    %c0_i32 = arith.constant 0 : i32
    %c0_i32_0 = arith.constant 0 : i32
    %c0_i32_1 = arith.constant 0 : i32
    return %c0_i32, %c0_i32_0 : i32, i32
  }
  func.func @transform_3(%arg0: i32, %arg1: i32) -> (i32, i32) {
    %c0_i32 = arith.constant 0 : i32
    %c0_i32_0 = arith.constant 0 : i32
    %c0_i32_1 = arith.constant 0 : i32
    return %c0_i32, %c0_i32_0 : i32, i32
  }
  func.func @transform_4(%arg0: i32, %arg1: i32) -> (i32, i32) {
    %c0_i32 = arith.constant 0 : i32
    %c0_i32_0 = arith.constant 0 : i32
    return %arg0, %c0_i32 : i32, i32
  }
}

</mosaic_0001>

<llo_original>
// kernel: vat_forward.1
$region0: #{vat_forward.1}
  #allocation0 [shape = 'u32[]', space=smem, size = 0x4, offset = 0x4, fixed_abs, tag = 'smem constant byte address 0x4 - core index']
  #allocation1 [shape = 'u32[144,128]{1,0:T(1,128)}', space=vmem, size = 0x12000, scoped, tag = 'internal scratch']
  #allocation2 [shape = 'f32[8,128]{1,0:T(8,128)}', space=vmem, size = 0x1000, scoped, tag = 'scratch operand']
  #allocation3 [shape = 'f32[8,128]{1,0:T(8,128)}', space=vmem, size = 0x1000, scoped, tag = 'scratch operand']
  #allocation4 [shape = 'f32[8,1]{1,0:T(8,128)}', space=vmem, size = 0x1000, scoped, tag = 'scratch operand']
  #allocation5 [shape = 'f32[128,128]{1,0:T(8,128)}', space=vmem, size = 0x10000, scoped, tag = 'scratch operand']
  %s0 = inlined_call_operand.vmem [shape: f32[8,1024], index: 0, kind: input, shape index: {}]
  %s1 = inlined_call_operand.vmem [shape: f32[8,1024], index: 1, kind: input, shape index: {}]
  %s2 = inlined_call_operand.vmem [shape: f32[1024,128], index: 2, kind: input, shape index: {}]
  %s3 = inlined_call_operand.vmem [shape: f32[1,128], index: 3, kind: input, shape index: {}]
  %s4 = inlined_call_operand.vmem [shape: f32[8,128], index: 4, kind: output, shape index: {}]
  %s5 = sld [smem:[#allocation0]]
  $region34: #{vat_forward.1} parent=0
    _
  %s7 = ssub.s32 1, %s5
  %s8 = scalar_select 0, %s7, %s5
  // Predicated region
  $region2: #{vat_forward.1} parent=0 // pred_check
    _
  $region3: #{vat_forward.1} parent=0 // pred_check_branch
    %10 = sbr.rel (0) target = $region5
  $region4: #{vat_forward.1} parent=0 // pred_region
    _
  $region5: #{vat_forward.1} parent=0 // pred_fallthru
    _
  // Predicated region
  $region6: #{vat_forward.1} parent=0 // pred_check
    _
  $region7: #{vat_forward.1} parent=0 // pred_check_branch
    %12 = sbr.rel (0) target = $region9
  $region8: #{vat_forward.1} parent=0 // pred_region
    _
  $region9: #{vat_forward.1} parent=0 // pred_fallthru
    _
  // Predicated region
  $region10: #{vat_forward.1} parent=0 // pred_check
    _
  $region11: #{vat_forward.1} parent=0 // pred_check_branch
    %14 = sbr.rel (0) target = $region13
  $region12: #{vat_forward.1} parent=0 // pred_region
    _
  $region13: #{vat_forward.1} parent=0 // pred_fallthru
    _
  // Predicated region
  $region14: #{vat_forward.1} parent=0 // pred_check
    _
  $region15: #{vat_forward.1} parent=0 // pred_check_branch
    %16 = sbr.rel (0) target = $region17
  $region16: #{vat_forward.1} parent=0 // pred_region
    _
  $region17: #{vat_forward.1} parent=0 // pred_fallthru
    _
  %p17 = scmp.eq.s32.totalorder 0, 0
  // Predicated region
  $region18: #{vat_forward.1} parent=0 // pred_check
    %p18 = pneg %p17
  $region19: #{vat_forward.1} parent=0 // pred_check_branch
    %20 = sbr.rel (%p18) target = $region21
  $region20: #{vat_forward.1} parent=0 // pred_region
    %21 = vst [vmem:[#allocation2] sm:$0xff] 0.0
    %22 = vst [vmem:[#allocation3] sm:$0xff] 0.0
    %vm23 = vcmask 7168
    %24 = vst.msk [vmem:[#allocation4] sm:$0xff] %vm23, 0.0
    %25 = vst [vmem:[#allocation5] sm:$0xff] 0.0
    %26 = vst [vmem:[#allocation5 + $0x8] sm:$0xff] 0.0
    %27 = vst [vmem:[#allocation5 + $0x10] sm:$0xff] 0.0
    %28 = vst [vmem:[#allocation5 + $0x18] sm:$0xff] 0.0
    %29 = vst [vmem:[#allocation5 + $0x20] sm:$0xff] 0.0
    %30 = vst [vmem:[#allocation5 + $0x28] sm:$0xff] 0.0
    %31 = vst [vmem:[#allocation5 + $0x30] sm:$0xff] 0.0
    %32 = vst [vmem:[#allocation5 + $0x38] sm:$0xff] 0.0
    %33 = vst [vmem:[#allocation5 + $0x40] sm:$0xff] 0.0
    %34 = vst [vmem:[#allocation5 + $0x48] sm:$0xff] 0.0
    %35 = vst [vmem:[#allocation5 + $0x50] sm:$0xff] 0.0
    %36 = vst [vmem:[#allocation5 + $0x58] sm:$0xff] 0.0
    %37 = vst [vmem:[#allocation5 + $0x60] sm:$0xff] 0.0
    %38 = vst [vmem:[#allocation5 + $0x68] sm:$0xff] 0.0
    %39 = vst [vmem:[#allocation5 + $0x70] sm:$0xff] 0.0
    %40 = vst [vmem:[#allocation5 + $0x78] sm:$0xff] 0.0
  $region21: #{vat_forward.1} parent=0 // pred_fallthru
    _
  %v41 = vld [vmem:[%s0] sm:$0xff]
  %v42 = vld [vmem:[%s0 + $0x8] sm:$0xff]
  %v43 = vld [vmem:[%s0 + $0x10] sm:$0xff]
  %v44 = vld [vmem:[%s0 + $0x18] sm:$0xff]
  %v45 = vld [vmem:[%s0 + $0x20] sm:$0xff]
  %v46 = vld [vmem:[%s0 + $0x28] sm:$0xff]
  %v47 = vld [vmem:[%s0 + $0x30] sm:$0xff]
  %v48 = vld [vmem:[%s0 + $0x38] sm:$0xff]
  %v49 = vld [vmem:[%s1] sm:$0xff]
  %v50 = vld [vmem:[%s1 + $0x8] sm:$0xff]
  %v51 = vld [vmem:[%s1 + $0x10] sm:$0xff]
  %v52 = vld [vmem:[%s1 + $0x18] sm:$0xff]
  %v53 = vld [vmem:[%s1 + $0x20] sm:$0xff]
  %v54 = vld [vmem:[%s1 + $0x28] sm:$0xff]
  %v55 = vld [vmem:[%s1 + $0x30] sm:$0xff]
  %v56 = vld [vmem:[%s1 + $0x38] sm:$0xff]
  %s57 = smul.u32 0, 1024
  %s58 = scalar_lea.vmem %s2, %s57
  %v59 = vld [vmem:[%s58] sm:$0xff]
  %v60 = vld [vmem:[%s58 + $0x8] sm:$0xff]
  %v61 = vld [vmem:[%s58 + $0x10] sm:$0xff]
  %v62 = vld [vmem:[%s58 + $0x18] sm:$0xff]
  %v63 = vld [vmem:[%s58 + $0x20] sm:$0xff]
  %v64 = vld [vmem:[%s58 + $0x28] sm:$0xff]
  %v65 = vld [vmem:[%s58 + $0x30] sm:$0xff]
  %v66 = vld [vmem:[%s58 + $0x38] sm:$0xff]
  %v67 = vld [vmem:[%s58 + $0x40] sm:$0xff]
  %v68 = vld [vmem:[%s58 + $0x48] sm:$0xff]
  %v69 = vld [vmem:[%s58 + $0x50] sm:$0xff]
  %v70 = vld [vmem:[%s58 + $0x58] sm:$0xff]
  %v71 = vld [vmem:[%s58 + $0x60] sm:$0xff]
  %v72 = vld [vmem:[%s58 + $0x68] sm:$0xff]
  %v73 = vld [vmem:[%s58 + $0x70] sm:$0xff]
  %v74 = vld [vmem:[%s58 + $0x78] sm:$0xff]
  %v75 = vld [vmem:[%s58 + $0x80] sm:$0xff]
  %v76 = vld [vmem:[%s58 + $0x88] sm:$0xff]
  %v77 = vld [vmem:[%s58 + $0x90] sm:$0xff]
  %v78 = vld [vmem:[%s58 + $0x98] sm:$0xff]
  %v79 = vld [vmem:[%s58 + $0xa0] sm:$0xff]
  %v80 = vld [vmem:[%s58 + $0xa8] sm:$0xff]
  %v81 = vld [vmem:[%s58 + $0xb0] sm:$0xff]
  %v82 = vld [vmem:[%s58 + $0xb8] sm:$0xff]
  %v83 = vld [vmem:[%s58 + $0xc0] sm:$0xff]
  %v84 = vld [vmem:[%s58 + $0xc8] sm:$0xff]
  %v85 = vld [vmem:[%s58 + $0xd0] sm:$0xff]
  %v86 = vld [vmem:[%s58 + $0xd8] sm:$0xff]
  %v87 = vld [vmem:[%s58 + $0xe0] sm:$0xff]
  %v88 = vld [vmem:[%s58 + $0xe8] sm:$0xff]
  %v89 = vld [vmem:[%s58 + $0xf0] sm:$0xff]
  %v90 = vld [vmem:[%s58 + $0xf8] sm:$0xff]
  %v91 = vld [vmem:[%s58 + $0x100] sm:$0xff]
  %v92 = vld [vmem:[%s58 + $0x108] sm:$0xff]
  %v93 = vld [vmem:[%s58 + $0x110] sm:$0xff]
  %v94 = vld [vmem:[%s58 + $0x118] sm:$0xff]
  %v95 = vld [vmem:[%s58 + $0x120] sm:$0xff]
  %v96 = vld [vmem:[%s58 + $0x128] sm:$0xff]
  %v97 = vld [vmem:[%s58 + $0x130] sm:$0xff]
  %v98 = vld [vmem:[%s58 + $0x138] sm:$0xff]
  %v99 = vld [vmem:[%s58 + $0x140] sm:$0xff]
  %v100 = vld [vmem:[%s58 + $0x148] sm:$0xff]
  %v101 = vld [vmem:[%s58 + $0x150] sm:$0xff]
  %v102 = vld [vmem:[%s58 + $0x158] sm:$0xff]
  %v103 = vld [vmem:[%s58 + $0x160] sm:$0xff]
  %v104 = vld [vmem:[%s58 + $0x168] sm:$0xff]
  %v105 = vld [vmem:[%s58 + $0x170] sm:$0xff]
  %v106 = vld [vmem:[%s58 + $0x178] sm:$0xff]
  %v107 = vld [vmem:[%s58 + $0x180] sm:$0xff]
  %v108 = vld [vmem:[%s58 + $0x188] sm:$0xff]
  %v109 = vld [vmem:[%s58 + $0x190] sm:$0xff]
  %v110 = vld [vmem:[%s58 + $0x198] sm:$0xff]
  %v111 = vld [vmem:[%s58 + $0x1a0] sm:$0xff]
  %v112 = vld [vmem:[%s58 + $0x1a8] sm:$0xff]
  %v113 = vld [vmem:[%s58 + $0x1b0] sm:$0xff]
  %v114 = vld [vmem:[%s58 + $0x1b8] sm:$0xff]
  %v115 = vld [vmem:[%s58 + $0x1c0] sm:$0xff]
  %v116 = vld [vmem:[%s58 + $0x1c8] sm:$0xff]
  %v117 = vld [vmem:[%s58 + $0x1d0] sm:$0xff]
  %v118 = vld [vmem:[%s58 + $0x1d8] sm:$0xff]
  %v119 = vld [vmem:[%s58 + $0x1e0] sm:$0xff]
  %v120 = vld [vmem:[%s58 + $0x1e8] sm:$0xff]
  %v121 = vld [vmem:[%s58 + $0x1f0] sm:$0xff]
  %v122 = vld [vmem:[%s58 + $0x1f8] sm:$0xff]
  %v123 = vld [vmem:[%s58 + $0x200] sm:$0xff]
  %v124 = vld [vmem:[%s58 + $0x208] sm:$0xff]
  %v125 = vld [vmem:[%s58 + $0x210] sm:$0xff]
  %v126 = vld [vmem:[%s58 + $0x218] sm:$0xff]
  %v127 = vld [vmem:[%s58 + $0x220] sm:$0xff]
  %v128 = vld [vmem:[%s58 + $0x228] sm:$0xff]
  %v129 = vld [vmem:[%s58 + $0x230] sm:$0xff]
  %v130 = vld [vmem:[%s58 + $0x238] sm:$0xff]
  %v131 = vld [vmem:[%s58 + $0x240] sm:$0xff]
  %v132 = vld [vmem:[%s58 + $0x248] sm:$0xff]
  %v133 = vld [vmem:[%s58 + $0x250] sm:$0xff]
  %v134 = vld [vmem:[%s58 + $0x258] sm:$0xff]
  %v135 = vld [vmem:[%s58 + $0x260] sm:$0xff]
  %v136 = vld [vmem:[%s58 + $0x268] sm:$0xff]
  %v137 = vld [vmem:[%s58 + $0x270] sm:$0xff]
  %v138 = vld [vmem:[%s58 + $0x278] sm:$0xff]
  %v139 = vld [vmem:[%s58 + $0x280] sm:$0xff]
  %v140 = vld [vmem:[%s58 + $0x288] sm:$0xff]
  %v141 = vld [vmem:[%s58 + $0x290] sm:$0xff]
  %v142 = vld [vmem:[%s58 + $0x298] sm:$0xff]
  %v143 = vld [vmem:[%s58 + $0x2a0] sm:$0xff]
  %v144 = vld [vmem:[%s58 + $0x2a8] sm:$0xff]
  %v145 = vld [vmem:[%s58 + $0x2b0] sm:$0xff]
  %v146 = vld [vmem:[%s58 + $0x2b8] sm:$0xff]
  %v147 = vld [vmem:[%s58 + $0x2c0] sm:$0xff]
  %v148 = vld [vmem:[%s58 + $0x2c8] sm:$0xff]
  %v149 = vld [vmem:[%s58 + $0x2d0] sm:$0xff]
  %v150 = vld [vmem:[%s58 + $0x2d8] sm:$0xff]
  %v151 = vld [vmem:[%s58 + $0x2e0] sm:$0xff]
  %v152 = vld [vmem:[%s58 + $0x2e8] sm:$0xff]
  %v153 = vld [vmem:[%s58 + $0x2f0] sm:$0xff]
  %v154 = vld [vmem:[%s58 + $0x2f8] sm:$0xff]
  %v155 = vld [vmem:[%s58 + $0x300] sm:$0xff]
  %v156 = vld [vmem:[%s58 + $0x308] sm:$0xff]
  %v157 = vld [vmem:[%s58 + $0x310] sm:$0xff]
  %v158 = vld [vmem:[%s58 + $0x318] sm:$0xff]
  %v159 = vld [vmem:[%s58 + $0x320] sm:$0xff]
  %v160 = vld [vmem:[%s58 + $0x328] sm:$0xff]
  %v161 = vld [vmem:[%s58 + $0x330] sm:$0xff]
  %v162 = vld [vmem:[%s58 + $0x338] sm:$0xff]
  %v163 = vld [vmem:[%s58 + $0x340] sm:$0xff]
  %v164 = vld [vmem:[%s58 + $0x348] sm:$0xff]
  %v165 = vld [vmem:[%s58 + $0x350] sm:$0xff]
  %v166 = vld [vmem:[%s58 + $0x358] sm:$0xff]
  %v167 = vld [vmem:[%s58 + $0x360] sm:$0xff]
  %v168 = vld [vmem:[%s58 + $0x368] sm:$0xff]
  %v169 = vld [vmem:[%s58 + $0x370] sm:$0xff]
  %v170 = vld [vmem:[%s58 + $0x378] sm:$0xff]
  %v171 = vld [vmem:[%s58 + $0x380] sm:$0xff]
  %v172 = vld [vmem:[%s58 + $0x388] sm:$0xff]
  %v173 = vld [vmem:[%s58 + $0x390] sm:$0xff]
  %v174 = vld [vmem:[%s58 + $0x398] sm:$0xff]
  %v175 = vld [vmem:[%s58 + $0x3a0] sm:$0xff]
  %v176 = vld [vmem:[%s58 + $0x3a8] sm:$0xff]
  %v177 = vld [vmem:[%s58 + $0x3b0] sm:$0xff]
  %v178 = vld [vmem:[%s58 + $0x3b8] sm:$0xff]
  %v179 = vld [vmem:[%s58 + $0x3c0] sm:$0xff]
  %v180 = vld [vmem:[%s58 + $0x3c8] sm:$0xff]
  %v181 = vld [vmem:[%s58 + $0x3d0] sm:$0xff]
  %v182 = vld [vmem:[%s58 + $0x3d8] sm:$0xff]
  %v183 = vld [vmem:[%s58 + $0x3e0] sm:$0xff]
  %v184 = vld [vmem:[%s58 + $0x3e8] sm:$0xff]
  %v185 = vld [vmem:[%s58 + $0x3f0] sm:$0xff]
  %v186 = vld [vmem:[%s58 + $0x3f8] sm:$0xff]
  %v187 = vld [vmem:[#allocation2] sm:$0xff]
  %188 = vmatprep.subr.mxu0 0.0
  %189 = vmatpush1.msra.mxu0 %v74
  %190 = vmatprep.subr.mxu0 0.0
  %191 = vmatpush1.msra.mxu0 %v73
  %192 = vmatprep.subr.mxu0 0.0
  %193 = vmatpush1.msra.mxu0 %v72
  %194 = vmatprep.subr.mxu0 0.0
  %195 = vmatpush1.msra.mxu0 %v71
  %196 = vmatprep.subr.mxu0 0.0
  %197 = vmatpush1.msra.mxu0 %v70
  %198 = vmatprep.subr.mxu0 0.0
  %199 = vmatpush1.msra.mxu0 %v69
  %200 = vmatprep.subr.mxu0 0.0
  %201 = vmatpush1.msra.mxu0 %v68
  %202 = vmatprep.subr.mxu0 0.0
  %203 = vmatpush1.msra.mxu0 %v67
  %204 = vmatprep.subr.mxu0 0.0
  %205 = vmatpush1.msra.mxu0 %v66
  %206 = vmatprep.subr.mxu0 0.0
  %207 = vmatpush1.msra.mxu0 %v65
  %208 = vmatprep.subr.mxu0 0.0
  %209 = vmatpush1.msra.mxu0 %v64
  %210 = vmatprep.subr.mxu0 0.0
  %211 = vmatpush1.msra.mxu0 %v63
  %212 = vmatprep.subr.mxu0 0.0
  %213 = vmatpush1.msra.mxu0 %v62
  %214 = vmatprep.subr.mxu0 0.0
  %215 = vmatpush1.msra.mxu0 %v61
  %216 = vmatprep.subr.mxu0 0.0
  %217 = vmatpush1.msra.mxu0 %v60
  %218 = vmatprep.subr.mxu0 0.0
  %219 = vmatpush1.msra.mxu0 %v59
  %220 = vmatprep.subr.mxu0 0.0
  %221 = vmatpush2.msra.mxu0 %v90
  %222 = vmatprep.subr.mxu0 0.0
  %223 = vmatpush2.msra.mxu0 %v89
  %224 = vmatprep.subr.mxu0 0.0
  %225 = vmatpush2.msra.mxu0 %v88
  %226 = vmatprep.subr.mxu0 0.0
  %227 = vmatpush2.msra.mxu0 %v87
  %228 = vmatprep.subr.mxu0 0.0
  %229 = vmatpush2.msra.mxu0 %v86
  %230 = vmatprep.subr.mxu0 0.0
  %231 = vmatpush2.msra.mxu0 %v85
  %232 = vmatprep.subr.mxu0 0.0
  %233 = vmatpush2.msra.mxu0 %v84
  %234 = vmatprep.subr.mxu0 0.0
  %235 = vmatpush2.msra.mxu0 %v83
  %236 = vmatprep.subr.mxu0 0.0
  %237 = vmatpush2.msra.mxu0 %v82
  %238 = vmatprep.subr.mxu0 0.0
  %239 = vmatpush2.msra.mxu0 %v81
  %240 = vmatprep.subr.mxu0 0.0
  %241 = vmatpush2.msra.mxu0 %v80
  %242 = vmatprep.subr.mxu0 0.0
  %243 = vmatpush2.msra.mxu0 %v79
  %244 = vmatprep.subr.mxu0 0.0
  %245 = vmatpush2.msra.mxu0 %v78
  %246 = vmatprep.subr.mxu0 0.0
  %247 = vmatpush2.msra.mxu0 %v77
  %248 = vmatprep.subr.mxu0 0.0
  %249 = vmatpush2.msra.mxu0 %v76
  %250 = vmatprep.subr.mxu0 0.0
  %251 = vmatpush2.msra.mxu0 %v75
  %252 = vmatprep.mubr.f32.mxu0 %v42
  %253 = vmatmul.mubr.f32.gmra.mxu0 %v41
  %v254 = vpop.f32.mrf.mxu0
  %v255 = vadd.f32 0.0, %v254
  %v256 = vpop.f32.mrf.mxu0
  %257 = vdwg.mxu0
  %258 = vmatprep.subr.mxu0 0.0
  %259 = vmatpush1.msra.mxu0 %v106
  %260 = vmatprep.subr.mxu0 0.0
  %261 = vmatpush1.msra.mxu0 %v105
  %262 = vmatprep.subr.mxu0 0.0
  %263 = vmatpush1.msra.mxu0 %v104
  %264 = vmatprep.subr.mxu0 0.0
  %265 = vmatpush1.msra.mxu0 %v103
  %266 = vmatprep.subr.mxu0 0.0
  %267 = vmatpush1.msra.mxu0 %v102
  %268 = vmatprep.subr.mxu0 0.0
  %269 = vmatpush1.msra.mxu0 %v101
  %270 = vmatprep.subr.mxu0 0.0
  %271 = vmatpush1.msra.mxu0 %v100
  %272 = vmatprep.subr.mxu0 0.0
  %273 = vmatpush1.msra.mxu0 %v99
  %274 = vmatprep.subr.mxu0 0.0
  %275 = vmatpush1.msra.mxu0 %v98
  %276 = vmatprep.subr.mxu0 0.0
  %277 = vmatpush1.msra.mxu0 %v97
  %278 = vmatprep.subr.mxu0 0.0
  %279 = vmatpush1.msra.mxu0 %v96
  %280 = vmatprep.subr.mxu0 0.0
  %281 = vmatpush1.msra.mxu0 %v95
  %282 = vmatprep.subr.mxu0 0.0
  %283 = vmatpush1.msra.mxu0 %v94
  %284 = vmatprep.subr.mxu0 0.0
  %285 = vmatpush1.msra.mxu0 %v93
  %286 = vmatprep.subr.mxu0 0.0
  %287 = vmatpush1.msra.mxu0 %v92
  %288 = vmatprep.subr.mxu0 0.0
  %289 = vmatpush1.msra.mxu0 %v91
  %290 = vmatprep.subr.mxu0 0.0
  %291 = vmatpush2.msra.mxu0 %v122
  %292 = vmatprep.subr.mxu0 0.0
  %293 = vmatpush2.msra.mxu0 %v121
  %294 = vmatprep.subr.mxu0 0.0
  %295 = vmatpush2.msra.mxu0 %v120
  %296 = vmatprep.subr.mxu0 0.0
  %297 = vmatpush2.msra.mxu0 %v119
  %298 = vmatprep.subr.mxu0 0.0
  %299 = vmatpush2.msra.mxu0 %v118
  %300 = vmatprep.subr.mxu0 0.0
  %301 = vmatpush2.msra.mxu0 %v117
  %302 = vmatprep.subr.mxu0 0.0
  %303 = vmatpush2.msra.mxu0 %v116
  %304 = vmatprep.subr.mxu0 0.0
  %305 = vmatpush2.msra.mxu0 %v115
  %306 = vmatprep.subr.mxu0 0.0
  %307 = vmatpush2.msra.mxu0 %v114
  %308 = vmatprep.subr.mxu0 0.0
  %309 = vmatpush2.msra.mxu0 %v113
  %310 = vmatprep.subr.mxu0 0.0
  %311 = vmatpush2.msra.mxu0 %v112
  %312 = vmatprep.subr.mxu0 0.0
  %313 = vmatpush2.msra.mxu0 %v111
  %314 = vmatprep.subr.mxu0 0.0
  %315 = vmatpush2.msra.mxu0 %v110
  %316 = vmatprep.subr.mxu0 0.0
  %317 = vmatpush2.msra.mxu0 %v109
  %318 = vmatprep.subr.mxu0 0.0
  %319 = vmatpush2.msra.mxu0 %v108
  %320 = vmatprep.subr.mxu0 0.0
  %321 = vmatpush2.msra.mxu0 %v107
  %322 = vmatprep.mubr.f32.mxu0 %v44
  %323 = vmatmul.mubr.f32.gmra.mxu0 %v43
  %v324 = vpop.f32.mrf.mxu0
  %v325 = vadd.f32 %v255, %v324
  %v326 = vpop.f32.mrf.mxu0
  %327 = vdwg.mxu0
  %328 = vmatprep.subr.mxu0 0.0
  %329 = vmatpush1.msra.mxu0 %v138
  %330 = vmatprep.subr.mxu0 0.0
  %331 = vmatpush1.msra.mxu0 %v137
  %332 = vmatprep.subr.mxu0 0.0
  %333 = vmatpush1.msra.mxu0 %v136
  %334 = vmatprep.subr.mxu0 0.0
  %335 = vmatpush1.msra.mxu0 %v135
  %336 = vmatprep.subr.mxu0 0.0
  %337 = vmatpush1.msra.mxu0 %v134
  %338 = vmatprep.subr.mxu0 0.0
  %339 = vmatpush1.msra.mxu0 %v133
  %340 = vmatprep.subr.mxu0 0.0
  %341 = vmatpush1.msra.mxu0 %v132
  %342 = vmatprep.subr.mxu0 0.0
  %343 = vmatpush1.msra.mxu0 %v131
  %344 = vmatprep.subr.mxu0 0.0
  %345 = vmatpush1.msra.mxu0 %v130
  %346 = vmatprep.subr.mxu0 0.0
  %347 = vmatpush1.msra.mxu0 %v129
  %348 = vmatprep.subr.mxu0 0.0
  %349 = vmatpush1.msra.mxu0 %v128
  %350 = vmatprep.subr.mxu0 0.0
  %351 = vmatpush1.msra.mxu0 %v127
  %352 = vmatprep.subr.mxu0 0.0
  %353 = vmatpush1.msra.mxu0 %v126
  %354 = vmatprep.subr.mxu0 0.0
  %355 = vmatpush1.msra.mxu0 %v125
  %356 = vmatprep.subr.mxu0 0.0
  %357 = vmatpush1.msra.mxu0 %v124
  %358 = vmatprep.subr.mxu0 0.0
  %359 = vmatpush1.msra.mxu0 %v123
  %360 = vmatprep.subr.mxu0 0.0
  %361 = vmatpush2.msra.mxu0 %v154
  %362 = vmatprep.subr.mxu0 0.0
  %363 = vmatpush2.msra.mxu0 %v153
  %364 = vmatprep.subr.mxu0 0.0
  %365 = vmatpush2.msra.mxu0 %v152
  %366 = vmatprep.subr.mxu0 0.0
  %367 = vmatpush2.msra.mxu0 %v151
  %368 = vmatprep.subr.mxu0 0.0
  %369 = vmatpush2.msra.mxu0 %v150
  %370 = vmatprep.subr.mxu0 0.0
  %371 = vmatpush2.msra.mxu0 %v149
  %372 = vmatprep.subr.mxu0 0.0
  %373 = vmatpush2.msra.mxu0 %v148
  %374 = vmatprep.subr.mxu0 0.0
  %375 = vmatpush2.msra.mxu0 %v147
  %376 = vmatprep.subr.mxu0 0.0
  %377 = vmatpush2.msra.mxu0 %v146
  %378 = vmatprep.subr.mxu0 0.0
  %379 = vmatpush2.msra.mxu0 %v145
  %380 = vmatprep.subr.mxu0 0.0
  %381 = vmatpush2.msra.mxu0 %v144
  %382 = vmatprep.subr.mxu0 0.0
  %383 = vmatpush2.msra.mxu0 %v143
  %384 = vmatprep.subr.mxu0 0.0
  %385 = vmatpush2.msra.mxu0 %v142
  %386 = vmatprep.subr.mxu0 0.0
  %387 = vmatpush2.msra.mxu0 %v141
  %388 = vmatprep.subr.mxu0 0.0
  %389 = vmatpush2.msra.mxu0 %v140
  %390 = vmatprep.subr.mxu0 0.0
  %391 = vmatpush2.msra.mxu0 %v139
  %392 = vmatprep.mubr.f32.mxu0 %v46
  %393 = vmatmul.mubr.f32.gmra.mxu0 %v45
  %v394 = vpop.f32.mrf.mxu0
  %v395 = vadd.f32 %v325, %v394
  %v396 = vpop.f32.mrf.mxu0
  %397 = vdwg.mxu0
  %398 = vmatprep.subr.mxu0 0.0
  %399 = vmatpush1.msra.mxu0 %v170
  %400 = vmatprep.subr.mxu0 0.0
  %401 = vmatpush1.msra.mxu0 %v169
  %402 = vmatprep.subr.mxu0 0.0
  %403 = vmatpush1.msra.mxu0 %v168
  %404 = vmatprep.subr.mxu0 0.0
  %405 = vmatpush1.msra.mxu0 %v167
  %406 = vmatprep.subr.mxu0 0.0
  %407 = vmatpush1.msra.mxu0 %v166
  %408 = vmatprep.subr.mxu0 0.0
  %409 = vmatpush1.msra.mxu0 %v165
  %410 = vmatprep.subr.mxu0 0.0
  %411 = vmatpush1.msra.mxu0 %v164
  %412 = vmatprep.subr.mxu0 0.0
  %413 = vmatpush1.msra.mxu0 %v163
  %414 = vmatprep.subr.mxu0 0.0
  %415 = vmatpush1.msra.mxu0 %v162
  %416 = vmatprep.subr.mxu0 0.0
  %417 = vmatpush1.msra.mxu0 %v161
  %418 = vmatprep.subr.mxu0 0.0
  %419 = vmatpush1.msra.mxu0 %v160
  %420 = vmatprep.subr.mxu0 0.0
  %421 = vmatpush1.msra.mxu0 %v159
  %422 = vmatprep.subr.mxu0 0.0
  %423 = vmatpush1.msra.mxu0 %v158
  %424 = vmatprep.subr.mxu0 0.0
  %425 = vmatpush1.msra.mxu0 %v157
  %426 = vmatprep.subr.mxu0 0.0
  %427 = vmatpush1.msra.mxu0 %v156
  %428 = vmatprep.subr.mxu0 0.0
  %429 = vmatpush1.msra.mxu0 %v155
  %430 = vmatprep.subr.mxu0 0.0
  %431 = vmatpush2.msra.mxu0 %v186
  %432 = vmatprep.subr.mxu0 0.0
  %433 = vmatpush2.msra.mxu0 %v185
  %434 = vmatprep.subr.mxu0 0.0
  %435 = vmatpush2.msra.mxu0 %v184
  %436 = vmatprep.subr.mxu0 0.0
  %437 = vmatpush2.msra.mxu0 %v183
  %438 = vmatprep.subr.mxu0 0.0
  %439 = vmatpush2.msra.mxu0 %v182
  %440 = vmatprep.subr.mxu0 0.0
  %441 = vmatpush2.msra.mxu0 %v181
  %442 = vmatprep.subr.mxu0 0.0
  %443 = vmatpush2.msra.mxu0 %v180
  %444 = vmatprep.subr.mxu0 0.0
  %445 = vmatpush2.msra.mxu0 %v179
  %446 = vmatprep.subr.mxu0 0.0
  %447 = vmatpush2.msra.mxu0 %v178
  %448 = vmatprep.subr.mxu0 0.0
  %449 = vmatpush2.msra.mxu0 %v177
  %450 = vmatprep.subr.mxu0 0.0
  %451 = vmatpush2.msra.mxu0 %v176
  %452 = vmatprep.subr.mxu0 0.0
  %453 = vmatpush2.msra.mxu0 %v175
  %454 = vmatprep.subr.mxu0 0.0
  %455 = vmatpush2.msra.mxu0 %v174
  %456 = vmatprep.subr.mxu0 0.0
  %457 = vmatpush2.msra.mxu0 %v173
  %458 = vmatprep.subr.mxu0 0.0
  %459 = vmatpush2.msra.mxu0 %v172
  %460 = vmatprep.subr.mxu0 0.0
  %461 = vmatpush2.msra.mxu0 %v171
  %462 = vmatprep.mubr.f32.mxu0 %v48
  %463 = vmatmul.mubr.f32.gmra.mxu0 %v47
  %v464 = vpop.f32.mrf.mxu0
  %v465 = vadd.f32 %v395, %v464
  %v466 = vpop.f32.mrf.mxu0
  %467 = vdwg.mxu0
  %v468 = vadd.f32 %v187, %v465
  %469 = vst [vmem:[#allocation2] sm:$0xff] %v468
  %v470 = vld [vmem:[#allocation3] sm:$0xff]
  %471 = vmatprep.subr.mxu0 0.0
  %472 = vmatpush1.msra.mxu0 %v74
  %473 = vmatprep.subr.mxu0 0.0
  %474 = vmatpush1.msra.mxu0 %v73
  %475 = vmatprep.subr.mxu0 0.0
  %476 = vmatpush1.msra.mxu0 %v72
  %477 = vmatprep.subr.mxu0 0.0
  %478 = vmatpush1.msra.mxu0 %v71
  %479 = vmatprep.subr.mxu0 0.0
  %480 = vmatpush1.msra.mxu0 %v70
  %481 = vmatprep.subr.mxu0 0.0
  %482 = vmatpush1.msra.mxu0 %v69
  %483 = vmatprep.subr.mxu0 0.0
  %484 = vmatpush1.msra.mxu0 %v68
  %485 = vmatprep.subr.mxu0 0.0
  %486 = vmatpush1.msra.mxu0 %v67
  %487 = vmatprep.subr.mxu0 0.0
  %488 = vmatpush1.msra.mxu0 %v66
  %489 = vmatprep.subr.mxu0 0.0
  %490 = vmatpush1.msra.mxu0 %v65
  %491 = vmatprep.subr.mxu0 0.0
  %492 = vmatpush1.msra.mxu0 %v64
  %493 = vmatprep.subr.mxu0 0.0
  %494 = vmatpush1.msra.mxu0 %v63
  %495 = vmatprep.subr.mxu0 0.0
  %496 = vmatpush1.msra.mxu0 %v62
  %497 = vmatprep.subr.mxu0 0.0
  %498 = vmatpush1.msra.mxu0 %v61
  %499 = vmatprep.subr.mxu0 0.0
  %500 = vmatpush1.msra.mxu0 %v60
  %501 = vmatprep.subr.mxu0 0.0
  %502 = vmatpush1.msra.mxu0 %v59
  %503 = vmatprep.subr.mxu0 0.0
  %504 = vmatpush2.msra.mxu0 %v90
  %505 = vmatprep.subr.mxu0 0.0
  %506 = vmatpush2.msra.mxu0 %v89
  %507 = vmatprep.subr.mxu0 0.0
  %508 = vmatpush2.msra.mxu0 %v88
  %509 = vmatprep.subr.mxu0 0.0
  %510 = vmatpush2.msra.mxu0 %v87
  %511 = vmatprep.subr.mxu0 0.0
  %512 = vmatpush2.msra.mxu0 %v86
  %513 = vmatprep.subr.mxu0 0.0
  %514 = vmatpush2.msra.mxu0 %v85
  %515 = vmatprep.subr.mxu0 0.0
  %516 = vmatpush2.msra.mxu0 %v84
  %517 = vmatprep.subr.mxu0 0.0
  %518 = vmatpush2.msra.mxu0 %v83
  %519 = vmatprep.subr.mxu0 0.0
  %520 = vmatpush2.msra.mxu0 %v82
  %521 = vmatprep.subr.mxu0 0.0
  %522 = vmatpush2.msra.mxu0 %v81
  %523 = vmatprep.subr.mxu0 0.0
  %524 = vmatpush2.msra.mxu0 %v80
  %525 = vmatprep.subr.mxu0 0.0
  %526 = vmatpush2.msra.mxu0 %v79
  %527 = vmatprep.subr.mxu0 0.0
  %528 = vmatpush2.msra.mxu0 %v78
  %529 = vmatprep.subr.mxu0 0.0
  %530 = vmatpush2.msra.mxu0 %v77
  %531 = vmatprep.subr.mxu0 0.0
  %532 = vmatpush2.msra.mxu0 %v76
  %533 = vmatprep.subr.mxu0 0.0
  %534 = vmatpush2.msra.mxu0 %v75
  %535 = vmatprep.mubr.f32.mxu0 %v50
  %536 = vmatmul.mubr.f32.gmra.mxu0 %v49
  %v537 = vpop.f32.mrf.mxu0
  %v538 = vadd.f32 0.0, %v537
  %v539 = vpop.f32.mrf.mxu0
  %540 = vdwg.mxu0
  %541 = vmatprep.subr.mxu0 0.0
  %542 = vmatpush1.msra.mxu0 %v106
  %543 = vmatprep.subr.mxu0 0.0
  %544 = vmatpush1.msra.mxu0 %v105
  %545 = vmatprep.subr.mxu0 0.0
  %546 = vmatpush1.msra.mxu0 %v104
  %547 = vmatprep.subr.mxu0 0.0
  %548 = vmatpush1.msra.mxu0 %v103
  %549 = vmatprep.subr.mxu0 0.0
  %550 = vmatpush1.msra.mxu0 %v102
  %551 = vmatprep.subr.mxu0 0.0
  %552 = vmatpush1.msra.mxu0 %v101
  %553 = vmatprep.subr.mxu0 0.0
  %554 = vmatpush1.msra.mxu0 %v100
  %555 = vmatprep.subr.mxu0 0.0
  %556 = vmatpush1.msra.mxu0 %v99
  %557 = vmatprep.subr.mxu0 0.0
  %558 = vmatpush1.msra.mxu0 %v98
  %559 = vmatprep.subr.mxu0 0.0
  %560 = vmatpush1.msra.mxu0 %v97
  %561 = vmatprep.subr.mxu0 0.0
  %562 = vmatpush1.msra.mxu0 %v96
  %563 = vmatprep.subr.mxu0 0.0
  %564 = vmatpush1.msra.mxu0 %v95
  %565 = vmatprep.subr.mxu0 0.0
  %566 = vmatpush1.msra.mxu0 %v94
  %567 = vmatprep.subr.mxu0 0.0
  %568 = vmatpush1.msra.mxu0 %v93
  %569 = vmatprep.subr.mxu0 0.0
  %570 = vmatpush1.msra.mxu0 %v92
  %571 = vmatprep.subr.mxu0 0.0
  %572 = vmatpush1.msra.mxu0 %v91
  %573 = vmatprep.subr.mxu0 0.0
  %574 = vmatpush2.msra.mxu0 %v122
  %575 = vmatprep.subr.mxu0 0.0
  %576 = vmatpush2.msra.mxu0 %v121
  %577 = vmatprep.subr.mxu0 0.0
  %578 = vmatpush2.msra.mxu0 %v120
  %579 = vmatprep.subr.mxu0 0.0
  %580 = vmatpush2.msra.mxu0 %v119
  %581 = vmatprep.subr.mxu0 0.0
  %582 = vmatpush2.msra.mxu0 %v118
  %583 = vmatprep.subr.mxu0 0.0
  %584 = vmatpush2.msra.mxu0 %v117
  %585 = vmatprep.subr.mxu0 0.0
  %586 = vmatpush2.msra.mxu0 %v116
  %587 = vmatprep.subr.mxu0 0.0
  %588 = vmatpush2.msra.mxu0 %v115
  %589 = vmatprep.subr.mxu0 0.0
  %590 = vmatpush2.msra.mxu0 %v114
  %591 = vmatprep.subr.mxu0 0.0
  %592 = vmatpush2.msra.mxu0 %v113
  %593 = vmatprep.subr.mxu0 0.0
  %594 = vmatpush2.msra.mxu0 %v112
  %595 = vmatprep.subr.mxu0 0.0
  %596 = vmatpush2.msra.mxu0 %v111
  %597 = vmatprep.subr.mxu0 0.0
  %598 = vmatpush2.msra.mxu0 %v110
  %599 = vmatprep.subr.mxu0 0.0
  %600 = vmatpush2.msra.mxu0 %v109
  %601 = vmatprep.subr.mxu0 0.0
  %602 = vmatpush2.msra.mxu0 %v108
  %603 = vmatprep.subr.mxu0 0.0
  %604 = vmatpush2.msra.mxu0 %v107
  %605 = vmatprep.mubr.f32.mxu0 %v52
  %606 = vmatmul.mubr.f32.gmra.mxu0 %v51
  %v607 = vpop.f32.mrf.mxu0
  %v608 = vadd.f32 %v538, %v607
  %v609 = vpop.f32.mrf.mxu0
  %610 = vdwg.mxu0
  %611 = vmatprep.subr.mxu0 0.0
  %612 = vmatpush1.msra.mxu0 %v138
  %613 = vmatprep.subr.mxu0 0.0
  %614 = vmatpush1.msra.mxu0 %v137
  %615 = vmatprep.subr.mxu0 0.0
  %616 = vmatpush1.msra.mxu0 %v136
  %617 = vmatprep.subr.mxu0 0.0
  %618 = vmatpush1.msra.mxu0 %v135
  %619 = vmatprep.subr.mxu0 0.0
  %620 = vmatpush1.msra.mxu0 %v134
  %621 = vmatprep.subr.mxu0 0.0
  %622 = vmatpush1.msra.mxu0 %v133
  %623 = vmatprep.subr.mxu0 0.0
  %624 = vmatpush1.msra.mxu0 %v132
  %625 = vmatprep.subr.mxu0 0.0
  %626 = vmatpush1.msra.mxu0 %v131
  %627 = vmatprep.subr.mxu0 0.0
  %628 = vmatpush1.msra.mxu0 %v130
  %629 = vmatprep.subr.mxu0 0.0
  %630 = vmatpush1.msra.mxu0 %v129
  %631 = vmatprep.subr.mxu0 0.0
  %632 = vmatpush1.msra.mxu0 %v128
  %633 = vmatprep.subr.mxu0 0.0
  %634 = vmatpush1.msra.mxu0 %v127
  %635 = vmatprep.subr.mxu0 0.0
  %636 = vmatpush1.msra.mxu0 %v126
  %637 = vmatprep.subr.mxu0 0.0
  %638 = vmatpush1.msra.mxu0 %v125
  %639 = vmatprep.subr.mxu0 0.0
  %640 = vmatpush1.msra.mxu0 %v124
  %641 = vmatprep.subr.mxu0 0.0
  %642 = vmatpush1.msra.mxu0 %v123
  %643 = vmatprep.subr.mxu0 0.0
  %644 = vmatpush2.msra.mxu0 %v154
  %645 = vmatprep.subr.mxu0 0.0
  %646 = vmatpush2.msra.mxu0 %v153
  %647 = vmatprep.subr.mxu0 0.0
  %648 = vmatpush2.msra.mxu0 %v152
  %649 = vmatprep.subr.mxu0 0.0
  %650 = vmatpush2.msra.mxu0 %v151
  %651 = vmatprep.subr.mxu0 0.0
  %652 = vmatpush2.msra.mxu0 %v150
  %653 = vmatprep.subr.mxu0 0.0
  %654 = vmatpush2.msra.mxu0 %v149
  %655 = vmatprep.subr.mxu0 0.0
  %656 = vmatpush2.msra.mxu0 %v148
  %657 = vmatprep.subr.mxu0 0.0
  %658 = vmatpush2.msra.mxu0 %v147
  %659 = vmatprep.subr.mxu0 0.0
  %660 = vmatpush2.msra.mxu0 %v146
  %661 = vmatprep.subr.mxu0 0.0
  %662 = vmatpush2.msra.mxu0 %v145
  %663 = vmatprep.subr.mxu0 0.0
  %664 = vmatpush2.msra.mxu0 %v144
  %665 = vmatprep.subr.mxu0 0.0
  %666 = vmatpush2.msra.mxu0 %v143
  %667 = vmatprep.subr.mxu0 0.0
  %668 = vmatpush2.msra.mxu0 %v142
  %669 = vmatprep.subr.mxu0 0.0
  %670 = vmatpush2.msra.mxu0 %v141
  %671 = vmatprep.subr.mxu0 0.0
  %672 = vmatpush2.msra.mxu0 %v140
  %673 = vmatprep.subr.mxu0 0.0
  %674 = vmatpush2.msra.mxu0 %v139
  %675 = vmatprep.mubr.f32.mxu0 %v54
  %676 = vmatmul.mubr.f32.gmra.mxu0 %v53
  %v677 = vpop.f32.mrf.mxu0
  %v678 = vadd.f32 %v608, %v677
  %v679 = vpop.f32.mrf.mxu0
  %680 = vdwg.mxu0
  %681 = vmatprep.subr.mxu0 0.0
  %682 = vmatpush1.msra.mxu0 %v170
  %683 = vmatprep.subr.mxu0 0.0
  %684 = vmatpush1.msra.mxu0 %v169
  %685 = vmatprep.subr.mxu0 0.0
  %686 = vmatpush1.msra.mxu0 %v168
  %687 = vmatprep.subr.mxu0 0.0
  %688 = vmatpush1.msra.mxu0 %v167
  %689 = vmatprep.subr.mxu0 0.0
  %690 = vmatpush1.msra.mxu0 %v166
  %691 = vmatprep.subr.mxu0 0.0
  %692 = vmatpush1.msra.mxu0 %v165
  %693 = vmatprep.subr.mxu0 0.0
  %694 = vmatpush1.msra.mxu0 %v164
  %695 = vmatprep.subr.mxu0 0.0
  %696 = vmatpush1.msra.mxu0 %v163
  %697 = vmatprep.subr.mxu0 0.0
  %698 = vmatpush1.msra.mxu0 %v162
  %699 = vmatprep.subr.mxu0 0.0
  %700 = vmatpush1.msra.mxu0 %v161
  %701 = vmatprep.subr.mxu0 0.0
  %702 = vmatpush1.msra.mxu0 %v160
  %703 = vmatprep.subr.mxu0 0.0
  %704 = vmatpush1.msra.mxu0 %v159
  %705 = vmatprep.subr.mxu0 0.0
  %706 = vmatpush1.msra.mxu0 %v158
  %707 = vmatprep.subr.mxu0 0.0
  %708 = vmatpush1.msra.mxu0 %v157
  %709 = vmatprep.subr.mxu0 0.0
  %710 = vmatpush1.msra.mxu0 %v156
  %711 = vmatprep.subr.mxu0 0.0
  %712 = vmatpush1.msra.mxu0 %v155
  %713 = vmatprep.subr.mxu0 0.0
  %714 = vmatpush2.msra.mxu0 %v186
  %715 = vmatprep.subr.mxu0 0.0
  %716 = vmatpush2.msra.mxu0 %v185
  %717 = vmatprep.subr.mxu0 0.0
  %718 = vmatpush2.msra.mxu0 %v184
  %719 = vmatprep.subr.mxu0 0.0
  %720 = vmatpush2.msra.mxu0 %v183
  %721 = vmatprep.subr.mxu0 0.0
  %722 = vmatpush2.msra.mxu0 %v182
  %723 = vmatprep.subr.mxu0 0.0
  %724 = vmatpush2.msra.mxu0 %v181
  %725 = vmatprep.subr.mxu0 0.0
  %726 = vmatpush2.msra.mxu0 %v180
  %727 = vmatprep.subr.mxu0 0.0
  %728 = vmatpush2.msra.mxu0 %v179
  %729 = vmatprep.subr.mxu0 0.0
  %730 = vmatpush2.msra.mxu0 %v178
  %731 = vmatprep.subr.mxu0 0.0
  %732 = vmatpush2.msra.mxu0 %v177
  %733 = vmatprep.subr.mxu0 0.0
  %734 = vmatpush2.msra.mxu0 %v176
  %735 = vmatprep.subr.mxu0 0.0
  %736 = vmatpush2.msra.mxu0 %v175
  %737 = vmatprep.subr.mxu0 0.0
  %738 = vmatpush2.msra.mxu0 %v174
  %739 = vmatprep.subr.mxu0 0.0
  %740 = vmatpush2.msra.mxu0 %v173
  %741 = vmatprep.subr.mxu0 0.0
  %742 = vmatpush2.msra.mxu0 %v172
  %743 = vmatprep.subr.mxu0 0.0
  %744 = vmatpush2.msra.mxu0 %v171
  %745 = vmatprep.mubr.f32.mxu0 %v56
  %746 = vmatmul.mubr.f32.gmra.mxu0 %v55
  %v747 = vpop.f32.mrf.mxu0
  %v748 = vadd.f32 %v678, %v747
  %v749 = vpop.f32.mrf.mxu0
  %750 = vdwg.mxu0
  %v751 = vadd.f32 %v470, %v748
  %752 = vst [vmem:[#allocation3] sm:$0xff] %v751
  %v753 = vld [vmem:[#allocation4] sm:$0xff]
  %v754 = vmul.f32 %v49, %v49
  %v755 = vmul.f32 %v50, %v50
  %v756 = vmul.f32 %v51, %v51
  %v757 = vmul.f32 %v52, %v52
  %v758 = vmul.f32 %v53, %v53
  %v759 = vmul.f32 %v54, %v54
  %v760 = vmul.f32 %v55, %v55
  %v761 = vmul.f32 %v56, %v56
  %v762 = vadd.f32 %v754, %v755
  %v763 = vadd.f32 %v762, %v756
  %v764 = vadd.f32 %v763, %v757
  %v765 = vadd.f32 %v764, %v758
  %v766 = vadd.f32 %v765, %v759
  %v767 = vadd.f32 %v766, %v760
  %v768 = vadd.f32 %v767, %v761
  %769 = vadd.xlane.f32.xlu0 %v768
  %v770 = vpop.xlane.xlu0 %769
  %v771 = vadd.f32 %v753, %v770
  %vm772 = vcmask 7168
  %773 = vst.msk [vmem:[#allocation4] sm:$0xff] %vm772, %v771
  %v774 = vld [vmem:[#allocation5] sm:$0xff]
  %v775 = vld [vmem:[#allocation5 + $0x8] sm:$0xff]
  %v776 = vld [vmem:[#allocation5 + $0x10] sm:$0xff]
  %v777 = vld [vmem:[#allocation5 + $0x18] sm:$0xff]
  %v778 = vld [vmem:[#allocation5 + $0x20] sm:$0xff]
  %v779 = vld [vmem:[#allocation5 + $0x28] sm:$0xff]
  %v780 = vld [vmem:[#allocation5 + $0x30] sm:$0xff]
  %v781 = vld [vmem:[#allocation5 + $0x38] sm:$0xff]
  %v782 = vld [vmem:[#allocation5 + $0x40] sm:$0xff]
  %v783 = vld [vmem:[#allocation5 + $0x48] sm:$0xff]
  %v784 = vld [vmem:[#allocation5 + $0x50] sm:$0xff]
  %v785 = vld [vmem:[#allocation5 + $0x58] sm:$0xff]
  %v786 = vld [vmem:[#allocation5 + $0x60] sm:$0xff]
  %v787 = vld [vmem:[#allocation5 + $0x68] sm:$0xff]
  %v788 = vld [vmem:[#allocation5 + $0x70] sm:$0xff]
  %v789 = vld [vmem:[#allocation5 + $0x78] sm:$0xff]
  %790 = vxpose.xlu0.b32.start [1/16] %v59, 128
  %791 = vxpose.xlu0.b32.cont [2/16] %v60, 128
  %792 = vxpose.xlu0.b32.cont [3/16] %v61, 128
  %793 = vxpose.xlu0.b32.cont [4/16] %v62, 128
  %794 = vxpose.xlu0.b32.cont [5/16] %v63, 128
  %795 = vxpose.xlu0.b32.cont [6/16] %v64, 128
  %796 = vxpose.xlu0.b32.cont [7/16] %v65, 128
  %797 = vxpose.xlu0.b32.cont [8/16] %v66, 128
  %798 = vxpose.xlu0.b32.cont [9/16] %v67, 128
  %799 = vxpose.xlu0.b32.cont [10/16] %v68, 128
  %800 = vxpose.xlu0.b32.cont [11/16] %v69, 128
  %801 = vxpose.xlu0.b32.cont [12/16] %v70, 128
  %802 = vxpose.xlu0.b32.cont [13/16] %v71, 128
  %803 = vxpose.xlu0.b32.cont [14/16] %v72, 128
  %804 = vxpose.xlu0.b32.cont [15/16] %v73, 128
  %805 = vxpose.xlu0.b32.end [16/16] %v74, 128
  %v806 = vpop.trf.xlu0
  %v807 = vpop.trf.xlu0
  %v808 = vpop.trf.xlu0
  %v809 = vpop.trf.xlu0
  %v810 = vpop.trf.xlu0
  %v811 = vpop.trf.xlu0
  %v812 = vpop.trf.xlu0
  %v813 = vpop.trf.xlu0
  %v814 = vpop.trf.xlu0
  %v815 = vpop.trf.xlu0
  %v816 = vpop.trf.xlu0
  %v817 = vpop.trf.xlu0
  %v818 = vpop.trf.xlu0
  %v819 = vpop.trf.xlu0
  %v820 = vpop.trf.xlu0
  %v821 = vpop.trf.xlu0
  %822 = vxpose.xlu0.b32.start [1/16] %v75, 128
  %823 = vxpose.xlu0.b32.cont [2/16] %v76, 128
  %824 = vxpose.xlu0.b32.cont [3/16] %v77, 128
  %825 = vxpose.xlu0.b32.cont [4/16] %v78, 128
  %826 = vxpose.xlu0.b32.cont [5/16] %v79, 128
  %827 = vxpose.xlu0.b32.cont [6/16] %v80, 128
  %828 = vxpose.xlu0.b32.cont [7/16] %v81, 128
  %829 = vxpose.xlu0.b32.cont [8/16] %v82, 128
  %830 = vxpose.xlu0.b32.cont [9/16] %v83, 128
  %831 = vxpose.xlu0.b32.cont [10/16] %v84, 128
  %832 = vxpose.xlu0.b32.cont [11/16] %v85, 128
  %833 = vxpose.xlu0.b32.cont [12/16] %v86, 128
  %834 = vxpose.xlu0.b32.cont [13/16] %v87, 128
  %835 = vxpose.xlu0.b32.cont [14/16] %v88, 128
  %836 = vxpose.xlu0.b32.cont [15/16] %v89, 128
  %837 = vxpose.xlu0.b32.end [16/16] %v90, 128
  %v838 = vpop.trf.xlu0
  %v839 = vpop.trf.xlu0
  %v840 = vpop.trf.xlu0
  %v841 = vpop.trf.xlu0
  %v842 = vpop.trf.xlu0
  %v843 = vpop.trf.xlu0
  %v844 = vpop.trf.xlu0
  %v845 = vpop.trf.xlu0
  %v846 = vpop.trf.xlu0
  %v847 = vpop.trf.xlu0
  %v848 = vpop.trf.xlu0
  %v849 = vpop.trf.xlu0
  %v850 = vpop.trf.xlu0
  %v851 = vpop.trf.xlu0
  %v852 = vpop.trf.xlu0
  %v853 = vpop.trf.xlu0
  %854 = vxpose.xlu0.b32.start [1/16] %v91, 128
  %855 = vxpose.xlu0.b32.cont [2/16] %v92, 128
  %856 = vxpose.xlu0.b32.cont [3/16] %v93, 128
  %857 = vxpose.xlu0.b32.cont [4/16] %v94, 128
  %858 = vxpose.xlu0.b32.cont [5/16] %v95, 128
  %859 = vxpose.xlu0.b32.cont [6/16] %v96, 128
  %860 = vxpose.xlu0.b32.cont [7/16] %v97, 128
  %861 = vxpose.xlu0.b32.cont [8/16] %v98, 128
  %862 = vxpose.xlu0.b32.cont [9/16] %v99, 128
  %863 = vxpose.xlu0.b32.cont [10/16] %v100, 128
  %864 = vxpose.xlu0.b32.cont [11/16] %v101, 128
  %865 = vxpose.xlu0.b32.cont [12/16] %v102, 128
  %866 = vxpose.xlu0.b32.cont [13/16] %v103, 128
  %867 = vxpose.xlu0.b32.cont [14/16] %v104, 128
  %868 = vxpose.xlu0.b32.cont [15/16] %v105, 128
  %869 = vxpose.xlu0.b32.end [16/16] %v106, 128
  %v870 = vpop.trf.xlu0
  %v871 = vpop.trf.xlu0
  %v872 = vpop.trf.xlu0
  %v873 = vpop.trf.xlu0
  %v874 = vpop.trf.xlu0
  %v875 = vpop.trf.xlu0
  %v876 = vpop.trf.xlu0
  %v877 = vpop.trf.xlu0
  %v878 = vpop.trf.xlu0
  %v879 = vpop.trf.xlu0
  %v880 = vpop.trf.xlu0
  %v881 = vpop.trf.xlu0
  %v882 = vpop.trf.xlu0
  %v883 = vpop.trf.xlu0
  %v884 = vpop.trf.xlu0
  %v885 = vpop.trf.xlu0
  %886 = vxpose.xlu0.b32.start [1/16] %v107, 128
  %887 = vxpose.xlu0.b32.cont [2/16] %v108, 128
  %888 = vxpose.xlu0.b32.cont [3/16] %v109, 128
  %889 = vxpose.xlu0.b32.cont [4/16] %v110, 128
  %890 = vxpose.xlu0.b32.cont [5/16] %v111, 128
  %891 = vxpose.xlu0.b32.cont [6/16] %v112, 128
  %892 = vxpose.xlu0.b32.cont [7/16] %v113, 128
  %893 = vxpose.xlu0.b32.cont [8/16] %v114, 128
  %894 = vxpose.xlu0.b32.cont [9/16] %v115, 128
  %895 = vxpose.xlu0.b32.cont [10/16] %v116, 128
  %896 = vxpose.xlu0.b32.cont [11/16] %v117, 128
  %897 = vxpose.xlu0.b32.cont [12/16] %v118, 128
  %898 = vxpose.xlu0.b32.cont [13/16] %v119, 128
  %899 = vxpose.xlu0.b32.cont [14/16] %v120, 128
  %900 = vxpose.xlu0.b32.cont [15/16] %v121, 128
  %901 = vxpose.xlu0.b32.end [16/16] %v122, 128
  %v902 = vpop.trf.xlu0
  %v903 = vpop.trf.xlu0
  %v904 = vpop.trf.xlu0
  %v905 = vpop.trf.xlu0
  %v906 = vpop.trf.xlu0
  %v907 = vpop.trf.xlu0
  %v908 = vpop.trf.xlu0
  %v909 = vpop.trf.xlu0
  %v910 = vpop.trf.xlu0
  %v911 = vpop.trf.xlu0
  %v912 = vpop.trf.xlu0
  %v913 = vpop.trf.xlu0
  %v914 = vpop.trf.xlu0
  %v915 = vpop.trf.xlu0
  %v916 = vpop.trf.xlu0
  %v917 = vpop.trf.xlu0
  %918 = vxpose.xlu0.b32.start [1/16] %v123, 128
  %919 = vxpose.xlu0.b32.cont [2/16] %v124, 128
  %920 = vxpose.xlu0.b32.cont [3/16] %v125, 128
  %921 = vxpose.xlu0.b32.cont [4/16] %v126, 128
  %922 = vxpose.xlu0.b32.cont [5/16] %v127, 128
  %923 = vxpose.xlu0.b32.cont [6/16] %v128, 128
  %924 = vxpose.xlu0.b32.cont [7/16] %v129, 128
  %925 = vxpose.xlu0.b32.cont [8/16] %v130, 128
  %926 = vxpose.xlu0.b32.cont [9/16] %v131, 128
  %927 = vxpose.xlu0.b32.cont [10/16] %v132, 128
  %928 = vxpose.xlu0.b32.cont [11/16] %v133, 128
  %929 = vxpose.xlu0.b32.cont [12/16] %v134, 128
  %930 = vxpose.xlu0.b32.cont [13/16] %v135, 128
  %931 = vxpose.xlu0.b32.cont [14/16] %v136, 128
  %932 = vxpose.xlu0.b32.cont [15/16] %v137, 128
  %933 = vxpose.xlu0.b32.end [16/16] %v138, 128
  %v934 = vpop.trf.xlu0
  %v935 = vpop.trf.xlu0
  %v936 = vpop.trf.xlu0
  %v937 = vpop.trf.xlu0
  %v938 = vpop.trf.xlu0
  %v939 = vpop.trf.xlu0
  %v940 = vpop.trf.xlu0
  %v941 = vpop.trf.xlu0
  %v942 = vpop.trf.xlu0
  %v943 = vpop.trf.xlu0
  %v944 = vpop.trf.xlu0
  %v945 = vpop.trf.xlu0
  %v946 = vpop.trf.xlu0
  %v947 = vpop.trf.xlu0
  %v948 = vpop.trf.xlu0
  %v949 = vpop.trf.xlu0
  %950 = vxpose.xlu0.b32.start [1/16] %v139, 128
  %951 = vxpose.xlu0.b32.cont [2/16] %v140, 128
  %952 = vxpose.xlu0.b32.cont [3/16] %v141, 128
  %953 = vxpose.xlu0.b32.cont [4/16] %v142, 128
  %954 = vxpose.xlu0.b32.cont [5/16] %v143, 128
  %955 = vxpose.xlu0.b32.cont [6/16] %v144, 128
  %956 = vxpose.xlu0.b32.cont [7/16] %v145, 128
  %957 = vxpose.xlu0.b32.cont [8/16] %v146, 128
  %958 = vxpose.xlu0.b32.cont [9/16] %v147, 128
  %959 = vxpose.xlu0.b32.cont [10/16] %v148, 128
  %960 = vxpose.xlu0.b32.cont [11/16] %v149, 128
  %961 = vxpose.xlu0.b32.cont [12/16] %v150, 128
  %962 = vxpose.xlu0.b32.cont [13/16] %v151, 128
  %963 = vxpose.xlu0.b32.cont [14/16] %v152, 128
  %964 = vxpose.xlu0.b32.cont [15/16] %v153, 128
  %965 = vxpose.xlu0.b32.end [16/16] %v154, 128
  %v966 = vpop.trf.xlu0
  %v967 = vpop.trf.xlu0
  %v968 = vpop.trf.xlu0
  %v969 = vpop.trf.xlu0
  %v970 = vpop.trf.xlu0
  %v971 = vpop.trf.xlu0
  %v972 = vpop.trf.xlu0
  %v973 = vpop.trf.xlu0
  %v974 = vpop.trf.xlu0
  %v975 = vpop.trf.xlu0
  %v976 = vpop.trf.xlu0
  %v977 = vpop.trf.xlu0
  %v978 = vpop.trf.xlu0
  %v979 = vpop.trf.xlu0
  %v980 = vpop.trf.xlu0
  %v981 = vpop.trf.xlu0
  %982 = vxpose.xlu0.b32.start [1/16] %v155, 128
  %983 = vxpose.xlu0.b32.cont [2/16] %v156, 128
  %984 = vxpose.xlu0.b32.cont [3/16] %v157, 128
  %985 = vxpose.xlu0.b32.cont [4/16] %v158, 128
  %986 = vxpose.xlu0.b32.cont [5/16] %v159, 128
  %987 = vxpose.xlu0.b32.cont [6/16] %v160, 128
  %988 = vxpose.xlu0.b32.cont [7/16] %v161, 128
  %989 = vxpose.xlu0.b32.cont [8/16] %v162, 128
  %990 = vxpose.xlu0.b32.cont [9/16] %v163, 128
  %991 = vxpose.xlu0.b32.cont [10/16] %v164, 128
  %992 = vxpose.xlu0.b32.cont [11/16] %v165, 128
  %993 = vxpose.xlu0.b32.cont [12/16] %v166, 128
  %994 = vxpose.xlu0.b32.cont [13/16] %v167, 128
  %995 = vxpose.xlu0.b32.cont [14/16] %v168, 128
  %996 = vxpose.xlu0.b32.cont [15/16] %v169, 128
  %997 = vxpose.xlu0.b32.end [16/16] %v170, 128
  %v998 = vpop.trf.xlu0
  %v999 = vpop.trf.xlu0
  %v1000 = vpop.trf.xlu0
  %v1001 = vpop.trf.xlu0
  %v1002 = vpop.trf.xlu0
  %v1003 = vpop.trf.xlu0
  %v1004 = vpop.trf.xlu0
  %v1005 = vpop.trf.xlu0
  %v1006 = vpop.trf.xlu0
  %v1007 = vpop.trf.xlu0
  %v1008 = vpop.trf.xlu0
  %v1009 = vpop.trf.xlu0
  %v1010 = vpop.trf.xlu0
  %v1011 = vpop.trf.xlu0
  %v1012 = vpop.trf.xlu0
  %v1013 = vpop.trf.xlu0
  %1014 = vxpose.xlu0.b32.start [1/16] %v171, 128
  %1015 = vxpose.xlu0.b32.cont [2/16] %v172, 128
  %1016 = vxpose.xlu0.b32.cont [3/16] %v173, 128
  %1017 = vxpose.xlu0.b32.cont [4/16] %v174, 128
  %1018 = vxpose.xlu0.b32.cont [5/16] %v175, 128
  %1019 = vxpose.xlu0.b32.cont [6/16] %v176, 128
  %1020 = vxpose.xlu0.b32.cont [7/16] %v177, 128
  %1021 = vxpose.xlu0.b32.cont [8/16] %v178, 128
  %1022 = vxpose.xlu0.b32.cont [9/16] %v179, 128
  %1023 = vxpose.xlu0.b32.cont [10/16] %v180, 128
  %1024 = vxpose.xlu0.b32.cont [11/16] %v181, 128
  %1025 = vxpose.xlu0.b32.cont [12/16] %v182, 128
  %1026 = vxpose.xlu0.b32.cont [13/16] %v183, 128
  %1027 = vxpose.xlu0.b32.cont [14/16] %v184, 128
  %1028 = vxpose.xlu0.b32.cont [15/16] %v185, 128
  %1029 = vxpose.xlu0.b32.end [16/16] %v186, 128
  %v1030 = vpop.trf.xlu0
  %v1031 = vpop.trf.xlu0
  %v1032 = vpop.trf.xlu0
  %v1033 = vpop.trf.xlu0
  %v1034 = vpop.trf.xlu0
  %v1035 = vpop.trf.xlu0
  %v1036 = vpop.trf.xlu0
  %v1037 = vpop.trf.xlu0
  %v1038 = vpop.trf.xlu0
  %v1039 = vpop.trf.xlu0
  %v1040 = vpop.trf.xlu0
  %v1041 = vpop.trf.xlu0
  %v1042 = vpop.trf.xlu0
  %v1043 = vpop.trf.xlu0
  %v1044 = vpop.trf.xlu0
  %v1045 = vpop.trf.xlu0
  %1046 = vmatprep.subr.mxu0 0.0
  %1047 = vmatpush1.msra.mxu0 %v74
  %1048 = vmatprep.subr.mxu0 0.0
  %1049 = vmatpush1.msra.mxu0 %v73
  %1050 = vmatprep.subr.mxu0 0.0
  %1051 = vmatpush1.msra.mxu0 %v72
  %1052 = vmatprep.subr.mxu0 0.0
  %1053 = vmatpush1.msra.mxu0 %v71
  %1054 = vmatprep.subr.mxu0 0.0
  %1055 = vmatpush1.msra.mxu0 %v70
  %1056 = vmatprep.subr.mxu0 0.0
  %1057 = vmatpush1.msra.mxu0 %v69
  %1058 = vmatprep.subr.mxu0 0.0
  %1059 = vmatpush1.msra.mxu0 %v68
  %1060 = vmatprep.subr.mxu0 0.0
  %1061 = vmatpush1.msra.mxu0 %v67
  %1062 = vmatprep.subr.mxu0 0.0
  %1063 = vmatpush1.msra.mxu0 %v66
  %1064 = vmatprep.subr.mxu0 0.0
  %1065 = vmatpush1.msra.mxu0 %v65
  %1066 = vmatprep.subr.mxu0 0.0
  %1067 = vmatpush1.msra.mxu0 %v64
  %1068 = vmatprep.subr.mxu0 0.0
  %1069 = vmatpush1.msra.mxu0 %v63
  %1070 = vmatprep.subr.mxu0 0.0
  %1071 = vmatpush1.msra.mxu0 %v62
  %1072 = vmatprep.subr.mxu0 0.0
  %1073 = vmatpush1.msra.mxu0 %v61
  %1074 = vmatprep.subr.mxu0 0.0
  %1075 = vmatpush1.msra.mxu0 %v60
  %1076 = vmatprep.subr.mxu0 0.0
  %1077 = vmatpush1.msra.mxu0 %v59
  %1078 = vmatprep.subr.mxu0 0.0
  %1079 = vmatpush2.msra.mxu0 %v90
  %1080 = vmatprep.subr.mxu0 0.0
  %1081 = vmatpush2.msra.mxu0 %v89
  %1082 = vmatprep.subr.mxu0 0.0
  %1083 = vmatpush2.msra.mxu0 %v88
  %1084 = vmatprep.subr.mxu0 0.0
  %1085 = vmatpush2.msra.mxu0 %v87
  %1086 = vmatprep.subr.mxu0 0.0
  %1087 = vmatpush2.msra.mxu0 %v86
  %1088 = vmatprep.subr.mxu0 0.0
  %1089 = vmatpush2.msra.mxu0 %v85
  %1090 = vmatprep.subr.mxu0 0.0
  %1091 = vmatpush2.msra.mxu0 %v84
  %1092 = vmatprep.subr.mxu0 0.0
  %1093 = vmatpush2.msra.mxu0 %v83
  %1094 = vmatprep.subr.mxu0 0.0
  %1095 = vmatpush2.msra.mxu0 %v82
  %1096 = vmatprep.subr.mxu0 0.0
  %1097 = vmatpush2.msra.mxu0 %v81
  %1098 = vmatprep.subr.mxu0 0.0
  %1099 = vmatpush2.msra.mxu0 %v80
  %1100 = vmatprep.subr.mxu0 0.0
  %1101 = vmatpush2.msra.mxu0 %v79
  %1102 = vmatprep.subr.mxu0 0.0
  %1103 = vmatpush2.msra.mxu0 %v78
  %1104 = vmatprep.subr.mxu0 0.0
  %1105 = vmatpush2.msra.mxu0 %v77
  %1106 = vmatprep.subr.mxu0 0.0
  %1107 = vmatpush2.msra.mxu0 %v76
  %1108 = vmatprep.subr.mxu0 0.0
  %1109 = vmatpush2.msra.mxu0 %v75
  %1110 = vmatprep.mubr.f32.mxu0 %v838
  %1111 = vmatmul.mubr.f32.gmra.mxu0 %v806
  %v1112 = vpop.f32.mrf.mxu0
  %v1113 = vadd.f32 0.0, %v1112
  %v1114 = vpop.f32.mrf.mxu0
  %1115 = vmatprep.mubr.f32.mxu0 %v839
  %1116 = vmatmul.mubr.f32.gmra.mxu0 %v807
  %v1117 = vpop.f32.mrf.mxu0
  %v1118 = vadd.f32 0.0, %v1117
  %v1119 = vpop.f32.mrf.mxu0
  %1120 = vmatprep.mubr.f32.mxu0 %v840
  %1121 = vmatmul.mubr.f32.gmra.mxu0 %v808
  %v1122 = vpop.f32.mrf.mxu0
  %v1123 = vadd.f32 0.0, %v1122
  %v1124 = vpop.f32.mrf.mxu0
  %1125 = vmatprep.mubr.f32.mxu0 %v841
  %1126 = vmatmul.mubr.f32.gmra.mxu0 %v809
  %v1127 = vpop.f32.mrf.mxu0
  %v1128 = vadd.f32 0.0, %v1127
  %v1129 = vpop.f32.mrf.mxu0
  %1130 = vmatprep.mubr.f32.mxu0 %v842
  %1131 = vmatmul.mubr.f32.gmra.mxu0 %v810
  %v1132 = vpop.f32.mrf.mxu0
  %v1133 = vadd.f32 0.0, %v1132
  %v1134 = vpop.f32.mrf.mxu0
  %1135 = vmatprep.mubr.f32.mxu0 %v843
  %1136 = vmatmul.mubr.f32.gmra.mxu0 %v811
  %v1137 = vpop.f32.mrf.mxu0
  %v1138 = vadd.f32 0.0, %v1137
  %v1139 = vpop.f32.mrf.mxu0
  %1140 = vmatprep.mubr.f32.mxu0 %v844
  %1141 = vmatmul.mubr.f32.gmra.mxu0 %v812
  %v1142 = vpop.f32.mrf.mxu0
  %v1143 = vadd.f32 0.0, %v1142
  %v1144 = vpop.f32.mrf.mxu0
  %1145 = vmatprep.mubr.f32.mxu0 %v845
  %1146 = vmatmul.mubr.f32.gmra.mxu0 %v813
  %v1147 = vpop.f32.mrf.mxu0
  %v1148 = vadd.f32 0.0, %v1147
  %v1149 = vpop.f32.mrf.mxu0
  %1150 = vmatprep.mubr.f32.mxu0 %v846
  %1151 = vmatmul.mubr.f32.gmra.mxu0 %v814
  %v1152 = vpop.f32.mrf.mxu0
  %v1153 = vadd.f32 0.0, %v1152
  %v1154 = vpop.f32.mrf.mxu0
  %1155 = vmatprep.mubr.f32.mxu0 %v847
  %1156 = vmatmul.mubr.f32.gmra.mxu0 %v815
  %v1157 = vpop.f32.mrf.mxu0
  %v1158 = vadd.f32 0.0, %v1157
  %v1159 = vpop.f32.mrf.mxu0
  %1160 = vmatprep.mubr.f32.mxu0 %v848
  %1161 = vmatmul.mubr.f32.gmra.mxu0 %v816
  %v1162 = vpop.f32.mrf.mxu0
  %v1163 = vadd.f32 0.0, %v1162
  %v1164 = vpop.f32.mrf.mxu0
  %1165 = vmatprep.mubr.f32.mxu0 %v849
  %1166 = vmatmul.mubr.f32.gmra.mxu0 %v817
  %v1167 = vpop.f32.mrf.mxu0
  %v1168 = vadd.f32 0.0, %v1167
  %v1169 = vpop.f32.mrf.mxu0
  %1170 = vmatprep.mubr.f32.mxu0 %v850
  %1171 = vmatmul.mubr.f32.gmra.mxu0 %v818
  %v1172 = vpop.f32.mrf.mxu0
  %v1173 = vadd.f32 0.0, %v1172
  %v1174 = vpop.f32.mrf.mxu0
  %1175 = vmatprep.mubr.f32.mxu0 %v851
  %1176 = vmatmul.mubr.f32.gmra.mxu0 %v819
  %v1177 = vpop.f32.mrf.mxu0
  %v1178 = vadd.f32 0.0, %v1177
  %v1179 = vpop.f32.mrf.mxu0
  %1180 = vmatprep.mubr.f32.mxu0 %v852
  %1181 = vmatmul.mubr.f32.gmra.mxu0 %v820
  %v1182 = vpop.f32.mrf.mxu0
  %v1183 = vadd.f32 0.0, %v1182
  %v1184 = vpop.f32.mrf.mxu0
  %1185 = vmatprep.mubr.f32.mxu0 %v853
  %1186 = vmatmul.mubr.f32.gmra.mxu0 %v821
  %v1187 = vpop.f32.mrf.mxu0
  %v1188 = vadd.f32 0.0, %v1187
  %v1189 = vpop.f32.mrf.mxu0
  %1190 = vdwg.mxu0
  %1191 = vmatprep.subr.mxu0 0.0
  %1192 = vmatpush1.msra.mxu0 %v106
  %1193 = vmatprep.subr.mxu0 0.0
  %1194 = vmatpush1.msra.mxu0 %v105
  %1195 = vmatprep.subr.mxu0 0.0
  %1196 = vmatpush1.msra.mxu0 %v104
  %1197 = vmatprep.subr.mxu0 0.0
  %1198 = vmatpush1.msra.mxu0 %v103
  %1199 = vmatprep.subr.mxu0 0.0
  %1200 = vmatpush1.msra.mxu0 %v102
  %1201 = vmatprep.subr.mxu0 0.0
  %1202 = vmatpush1.msra.mxu0 %v101
  %1203 = vmatprep.subr.mxu0 0.0
  %1204 = vmatpush1.msra.mxu0 %v100
  %1205 = vmatprep.subr.mxu0 0.0
  %1206 = vmatpush1.msra.mxu0 %v99
  %1207 = vmatprep.subr.mxu0 0.0
  %1208 = vmatpush1.msra.mxu0 %v98
  %1209 = vmatprep.subr.mxu0 0.0
  %1210 = vmatpush1.msra.mxu0 %v97
  %1211 = vmatprep.subr.mxu0 0.0
  %1212 = vmatpush1.msra.mxu0 %v96
  %1213 = vmatprep.subr.mxu0 0.0
  %1214 = vmatpush1.msra.mxu0 %v95
  %1215 = vmatprep.subr.mxu0 0.0
  %1216 = vmatpush1.msra.mxu0 %v94
  %1217 = vmatprep.subr.mxu0 0.0
  %1218 = vmatpush1.msra.mxu0 %v93
  %1219 = vmatprep.subr.mxu0 0.0
  %1220 = vmatpush1.msra.mxu0 %v92
  %1221 = vmatprep.subr.mxu0 0.0
  %1222 = vmatpush1.msra.mxu0 %v91
  %1223 = vmatprep.subr.mxu0 0.0
  %1224 = vmatpush2.msra.mxu0 %v122
  %1225 = vmatprep.subr.mxu0 0.0
  %1226 = vmatpush2.msra.mxu0 %v121
  %1227 = vmatprep.subr.mxu0 0.0
  %1228 = vmatpush2.msra.mxu0 %v120
  %1229 = vmatprep.subr.mxu0 0.0
  %1230 = vmatpush2.msra.mxu0 %v119
  %1231 = vmatprep.subr.mxu0 0.0
  %1232 = vmatpush2.msra.mxu0 %v118
  %1233 = vmatprep.subr.mxu0 0.0
  %1234 = vmatpush2.msra.mxu0 %v117
  %1235 = vmatprep.subr.mxu0 0.0
  %1236 = vmatpush2.msra.mxu0 %v116
  %1237 = vmatprep.subr.mxu0 0.0
  %1238 = vmatpush2.msra.mxu0 %v115
  %1239 = vmatprep.subr.mxu0 0.0
  %1240 = vmatpush2.msra.mxu0 %v114
  %1241 = vmatprep.subr.mxu0 0.0
  %1242 = vmatpush2.msra.mxu0 %v113
  %1243 = vmatprep.subr.mxu0 0.0
  %1244 = vmatpush2.msra.mxu0 %v112
  %1245 = vmatprep.subr.mxu0 0.0
  %1246 = vmatpush2.msra.mxu0 %v111
  %1247 = vmatprep.subr.mxu0 0.0
  %1248 = vmatpush2.msra.mxu0 %v110
  %1249 = vmatprep.subr.mxu0 0.0
  %1250 = vmatpush2.msra.mxu0 %v109
  %1251 = vmatprep.subr.mxu0 0.0
  %1252 = vmatpush2.msra.mxu0 %v108
  %1253 = vmatprep.subr.mxu0 0.0
  %1254 = vmatpush2.msra.mxu0 %v107
  %1255 = vmatprep.mubr.f32.mxu0 %v902
  %1256 = vmatmul.mubr.f32.gmra.mxu0 %v870
  %v1257 = vpop.f32.mrf.mxu0
  %v1258 = vadd.f32 %v1113, %v1257
  %v1259 = vpop.f32.mrf.mxu0
  %1260 = vmatprep.mubr.f32.mxu0 %v903
  %1261 = vmatmul.mubr.f32.gmra.mxu0 %v871
  %v1262 = vpop.f32.mrf.mxu0
  %v1263 = vadd.f32 %v1118, %v1262
  %v1264 = vpop.f32.mrf.mxu0
  %1265 = vmatprep.mubr.f32.mxu0 %v904
  %1266 = vmatmul.mubr.f32.gmra.mxu0 %v872
  %v1267 = vpop.f32.mrf.mxu0
  %v1268 = vadd.f32 %v1123, %v1267
  %v1269 = vpop.f32.mrf.mxu0
  %1270 = vmatprep.mubr.f32.mxu0 %v905
  %1271 = vmatmul.mubr.f32.gmra.mxu0 %v873
  %v1272 = vpop.f32.mrf.mxu0
  %v1273 = vadd.f32 %v1128, %v1272
  %v1274 = vpop.f32.mrf.mxu0
  %1275 = vmatprep.mubr.f32.mxu0 %v906
  %1276 = vmatmul.mubr.f32.gmra.mxu0 %v874
  %v1277 = vpop.f32.mrf.mxu0
  %v1278 = vadd.f32 %v1133, %v1277
  %v1279 = vpop.f32.mrf.mxu0
  %1280 = vmatprep.mubr.f32.mxu0 %v907
  %1281 = vmatmul.mubr.f32.gmra.mxu0 %v875
  %v1282 = vpop.f32.mrf.mxu0
  %v1283 = vadd.f32 %v1138, %v1282
  %v1284 = vpop.f32.mrf.mxu0
  %1285 = vmatprep.mubr.f32.mxu0 %v908
  %1286 = vmatmul.mubr.f32.gmra.mxu0 %v876
  %v1287 = vpop.f32.mrf.mxu0
  %v1288 = vadd.f32 %v1143, %v1287
  %v1289 = vpop.f32.mrf.mxu0
  %1290 = vmatprep.mubr.f32.mxu0 %v909
  %1291 = vmatmul.mubr.f32.gmra.mxu0 %v877
  %v1292 = vpop.f32.mrf.mxu0
  %v1293 = vadd.f32 %v1148, %v1292
  %v1294 = vpop.f32.mrf.mxu0
  %1295 = vmatprep.mubr.f32.mxu0 %v910
  %1296 = vmatmul.mubr.f32.gmra.mxu0 %v878
  %v1297 = vpop.f32.mrf.mxu0
  %v1298 = vadd.f32 %v1153, %v1297
  %v1299 = vpop.f32.mrf.mxu0
  %1300 = vmatprep.mubr.f32.mxu0 %v911
  %1301 = vmatmul.mubr.f32.gmra.mxu0 %v879
  %v1302 = vpop.f32.mrf.mxu0
  %v1303 = vadd.f32 %v1158, %v1302
  %v1304 = vpop.f32.mrf.mxu0
  %1305 = vmatprep.mubr.f32.mxu0 %v912
  %1306 = vmatmul.mubr.f32.gmra.mxu0 %v880
  %v1307 = vpop.f32.mrf.mxu0
  %v1308 = vadd.f32 %v1163, %v1307
  %v1309 = vpop.f32.mrf.mxu0
  %1310 = vmatprep.mubr.f32.mxu0 %v913
  %1311 = vmatmul.mubr.f32.gmra.mxu0 %v881
  %v1312 = vpop.f32.mrf.mxu0
  %v1313 = vadd.f32 %v1168, %v1312
  %v1314 = vpop.f32.mrf.mxu0
  %1315 = vmatprep.mubr.f32.mxu0 %v914
  %1316 = vmatmul.mubr.f32.gmra.mxu0 %v882
  %v1317 = vpop.f32.mrf.mxu0
  %v1318 = vadd.f32 %v1173, %v1317
  %v1319 = vpop.f32.mrf.mxu0
  %1320 = vmatprep.mubr.f32.mxu0 %v915
  %1321 = vmatmul.mubr.f32.gmra.mxu0 %v883
  %v1322 = vpop.f32.mrf.mxu0
  %v1323 = vadd.f32 %v1178, %v1322
  %v1324 = vpop.f32.mrf.mxu0
  %1325 = vmatprep.mubr.f32.mxu0 %v916
  %1326 = vmatmul.mubr.f32.gmra.mxu0 %v884
  %v1327 = vpop.f32.mrf.mxu0
  %v1328 = vadd.f32 %v1183, %v1327
  %v1329 = vpop.f32.mrf.mxu0
  %1330 = vmatprep.mubr.f32.mxu0 %v917
  %1331 = vmatmul.mubr.f32.gmra.mxu0 %v885
  %v1332 = vpop.f32.mrf.mxu0
  %v1333 = vadd.f32 %v1188, %v1332
  %v1334 = vpop.f32.mrf.mxu0
  %1335 = vdwg.mxu0
  %1336 = vmatprep.subr.mxu0 0.0
  %1337 = vmatpush1.msra.mxu0 %v138
  %1338 = vmatprep.subr.mxu0 0.0
  %1339 = vmatpush1.msra.mxu0 %v137
  %1340 = vmatprep.subr.mxu0 0.0
  %1341 = vmatpush1.msra.mxu0 %v136
  %1342 = vmatprep.subr.mxu0 0.0
  %1343 = vmatpush1.msra.mxu0 %v135
  %1344 = vmatprep.subr.mxu0 0.0
  %1345 = vmatpush1.msra.mxu0 %v134
  %1346 = vmatprep.subr.mxu0 0.0
  %1347 = vmatpush1.msra.mxu0 %v133
  %1348 = vmatprep.subr.mxu0 0.0
  %1349 = vmatpush1.msra.mxu0 %v132
  %1350 = vmatprep.subr.mxu0 0.0
  %1351 = vmatpush1.msra.mxu0 %v131
  %1352 = vmatprep.subr.mxu0 0.0
  %1353 = vmatpush1.msra.mxu0 %v130
  %1354 = vmatprep.subr.mxu0 0.0
  %1355 = vmatpush1.msra.mxu0 %v129
  %1356 = vmatprep.subr.mxu0 0.0
  %1357 = vmatpush1.msra.mxu0 %v128
  %1358 = vmatprep.subr.mxu0 0.0
  %1359 = vmatpush1.msra.mxu0 %v127
  %1360 = vmatprep.subr.mxu0 0.0
  %1361 = vmatpush1.msra.mxu0 %v126
  %1362 = vmatprep.subr.mxu0 0.0
  %1363 = vmatpush1.msra.mxu0 %v125
  %1364 = vmatprep.subr.mxu0 0.0
  %1365 = vmatpush1.msra.mxu0 %v124
  %1366 = vmatprep.subr.mxu0 0.0
  %1367 = vmatpush1.msra.mxu0 %v123
  %1368 = vmatprep.subr.mxu0 0.0
  %1369 = vmatpush2.msra.mxu0 %v154
  %1370 = vmatprep.subr.mxu0 0.0
  %1371 = vmatpush2.msra.mxu0 %v153
  %1372 = vmatprep.subr.mxu0 0.0
  %1373 = vmatpush2.msra.mxu0 %v152
  %1374 = vmatprep.subr.mxu0 0.0
  %1375 = vmatpush2.msra.mxu0 %v151
  %1376 = vmatprep.subr.mxu0 0.0
  %1377 = vmatpush2.msra.mxu0 %v150
  %1378 = vmatprep.subr.mxu0 0.0
  %1379 = vmatpush2.msra.mxu0 %v149
  %1380 = vmatprep.subr.mxu0 0.0
  %1381 = vmatpush2.msra.mxu0 %v148
  %1382 = vmatprep.subr.mxu0 0.0
  %1383 = vmatpush2.msra.mxu0 %v147
  %1384 = vmatprep.subr.mxu0 0.0
  %1385 = vmatpush2.msra.mxu0 %v146
  %1386 = vmatprep.subr.mxu0 0.0
  %1387 = vmatpush2.msra.mxu0 %v145
  %1388 = vmatprep.subr.mxu0 0.0
  %1389 = vmatpush2.msra.mxu0 %v144
  %1390 = vmatprep.subr.mxu0 0.0
  %1391 = vmatpush2.msra.mxu0 %v143
  %1392 = vmatprep.subr.mxu0 0.0
  %1393 = vmatpush2.msra.mxu0 %v142
  %1394 = vmatprep.subr.mxu0 0.0
  %1395 = vmatpush2.msra.mxu0 %v141
  %1396 = vmatprep.subr.mxu0 0.0
  %1397 = vmatpush2.msra.mxu0 %v140
  %1398 = vmatprep.subr.mxu0 0.0
  %1399 = vmatpush2.msra.mxu0 %v139
  %1400 = vmatprep.mubr.f32.mxu0 %v966
  %1401 = vmatmul.mubr.f32.gmra.mxu0 %v934
  %v1402 = vpop.f32.mrf.mxu0
  %v1403 = vadd.f32 %v1258, %v1402
  %v1404 = vpop.f32.mrf.mxu0
  %1405 = vmatprep.mubr.f32.mxu0 %v967
  %1406 = vmatmul.mubr.f32.gmra.mxu0 %v935
  %v1407 = vpop.f32.mrf.mxu0
  %v1408 = vadd.f32 %v1263, %v1407
  %v1409 = vpop.f32.mrf.mxu0
  %1410 = vmatprep.mubr.f32.mxu0 %v968
  %1411 = vmatmul.mubr.f32.gmra.mxu0 %v936
  %v1412 = vpop.f32.mrf.mxu0
  %v1413 = vadd.f32 %v1268, %v1412
  %v1414 = vpop.f32.mrf.mxu0
  %1415 = vmatprep.mubr.f32.mxu0 %v969
  %1416 = vmatmul.mubr.f32.gmra.mxu0 %v937
  %v1417 = vpop.f32.mrf.mxu0
  %v1418 = vadd.f32 %v1273, %v1417
  %v1419 = vpop.f32.mrf.mxu0
  %1420 = vmatprep.mubr.f32.mxu0 %v970
  %1421 = vmatmul.mubr.f32.gmra.mxu0 %v938
  %v1422 = vpop.f32.mrf.mxu0
  %v1423 = vadd.f32 %v1278, %v1422
  %v1424 = vpop.f32.mrf.mxu0
  %1425 = vmatprep.mubr.f32.mxu0 %v971
  %1426 = vmatmul.mubr.f32.gmra.mxu0 %v939
  %v1427 = vpop.f32.mrf.mxu0
  %v1428 = vadd.f32 %v1283, %v1427
  %v1429 = vpop.f32.mrf.mxu0
  %1430 = vmatprep.mubr.f32.mxu0 %v972
  %1431 = vmatmul.mubr.f32.gmra.mxu0 %v940
  %v1432 = vpop.f32.mrf.mxu0
  %v1433 = vadd.f32 %v1288, %v1432
  %v1434 = vpop.f32.mrf.mxu0
  %1435 = vmatprep.mubr.f32.mxu0 %v973
  %1436 = vmatmul.mubr.f32.gmra.mxu0 %v941
  %v1437 = vpop.f32.mrf.mxu0
  %v1438 = vadd.f32 %v1293, %v1437
  %v1439 = vpop.f32.mrf.mxu0
  %1440 = vmatprep.mubr.f32.mxu0 %v974
  %1441 = vmatmul.mubr.f32.gmra.mxu0 %v942
  %v1442 = vpop.f32.mrf.mxu0
  %v1443 = vadd.f32 %v1298, %v1442
  %v1444 = vpop.f32.mrf.mxu0
  %1445 = vmatprep.mubr.f32.mxu0 %v975
  %1446 = vmatmul.mubr.f32.gmra.mxu0 %v943
  %v1447 = vpop.f32.mrf.mxu0
  %v1448 = vadd.f32 %v1303, %v1447
  %v1449 = vpop.f32.mrf.mxu0
  %1450 = vmatprep.mubr.f32.mxu0 %v976
  %1451 = vmatmul.mubr.f32.gmra.mxu0 %v944
  %v1452 = vpop.f32.mrf.mxu0
  %v1453 = vadd.f32 %v1308, %v1452
  %v1454 = vpop.f32.mrf.mxu0
  %1455 = vmatprep.mubr.f32.mxu0 %v977
  %1456 = vmatmul.mubr.f32.gmra.mxu0 %v945
  %v1457 = vpop.f32.mrf.mxu0
  %v1458 = vadd.f32 %v1313, %v1457
  %v1459 = vpop.f32.mrf.mxu0
  %1460 = vmatprep.mubr.f32.mxu0 %v978
  %1461 = vmatmul.mubr.f32.gmra.mxu0 %v946
  %v1462 = vpop.f32.mrf.mxu0
  %v1463 = vadd.f32 %v1318, %v1462
  %v1464 = vpop.f32.mrf.mxu0
  %1465 = vmatprep.mubr.f32.mxu0 %v979
  %1466 = vmatmul.mubr.f32.gmra.mxu0 %v947
  %v1467 = vpop.f32.mrf.mxu0
  %v1468 = vadd.f32 %v1323, %v1467
  %v1469 = vpop.f32.mrf.mxu0
  %1470 = vmatprep.mubr.f32.mxu0 %v980
  %1471 = vmatmul.mubr.f32.gmra.mxu0 %v948
  %v1472 = vpop.f32.mrf.mxu0
  %v1473 = vadd.f32 %v1328, %v1472
  %v1474 = vpop.f32.mrf.mxu0
  %1475 = vmatprep.mubr.f32.mxu0 %v981
  %1476 = vmatmul.mubr.f32.gmra.mxu0 %v949
  %v1477 = vpop.f32.mrf.mxu0
  %v1478 = vadd.f32 %v1333, %v1477
  %v1479 = vpop.f32.mrf.mxu0
  %1480 = vdwg.mxu0
  %1481 = vmatprep.subr.mxu0 0.0
  %1482 = vmatpush1.msra.mxu0 %v170
  %1483 = vmatprep.subr.mxu0 0.0
  %1484 = vmatpush1.msra.mxu0 %v169
  %1485 = vmatprep.subr.mxu0 0.0
  %1486 = vmatpush1.msra.mxu0 %v168
  %1487 = vmatprep.subr.mxu0 0.0
  %1488 = vmatpush1.msra.mxu0 %v167
  %1489 = vmatprep.subr.mxu0 0.0
  %1490 = vmatpush1.msra.mxu0 %v166
  %1491 = vmatprep.subr.mxu0 0.0
  %1492 = vmatpush1.msra.mxu0 %v165
  %1493 = vmatprep.subr.mxu0 0.0
  %1494 = vmatpush1.msra.mxu0 %v164
  %1495 = vmatprep.subr.mxu0 0.0
  %1496 = vmatpush1.msra.mxu0 %v163
  %1497 = vmatprep.subr.mxu0 0.0
  %1498 = vmatpush1.msra.mxu0 %v162
  %1499 = vmatprep.subr.mxu0 0.0
  %1500 = vmatpush1.msra.mxu0 %v161
  %1501 = vmatprep.subr.mxu0 0.0
  %1502 = vmatpush1.msra.mxu0 %v160
  %1503 = vmatprep.subr.mxu0 0.0
  %1504 = vmatpush1.msra.mxu0 %v159
  %1505 = vmatprep.subr.mxu0 0.0
  %1506 = vmatpush1.msra.mxu0 %v158
  %1507 = vmatprep.subr.mxu0 0.0
  %1508 = vmatpush1.msra.mxu0 %v157
  %1509 = vmatprep.subr.mxu0 0.0
  %1510 = vmatpush1.msra.mxu0 %v156
  %1511 = vmatprep.subr.mxu0 0.0
  %1512 = vmatpush1.msra.mxu0 %v155
  %1513 = vmatprep.subr.mxu0 0.0
  %1514 = vmatpush2.msra.mxu0 %v186
  %1515 = vmatprep.subr.mxu0 0.0
  %1516 = vmatpush2.msra.mxu0 %v185
  %1517 = vmatprep.subr.mxu0 0.0
  %1518 = vmatpush2.msra.mxu0 %v184
  %1519 = vmatprep.subr.mxu0 0.0
  %1520 = vmatpush2.msra.mxu0 %v183
  %1521 = vmatprep.subr.mxu0 0.0
  %1522 = vmatpush2.msra.mxu0 %v182
  %1523 = vmatprep.subr.mxu0 0.0
  %1524 = vmatpush2.msra.mxu0 %v181
  %1525 = vmatprep.subr.mxu0 0.0
  %1526 = vmatpush2.msra.mxu0 %v180
  %1527 = vmatprep.subr.mxu0 0.0
  %1528 = vmatpush2.msra.mxu0 %v179
  %1529 = vmatprep.subr.mxu0 0.0
  %1530 = vmatpush2.msra.mxu0 %v178
  %1531 = vmatprep.subr.mxu0 0.0
  %1532 = vmatpush2.msra.mxu0 %v177
  %1533 = vmatprep.subr.mxu0 0.0
  %1534 = vmatpush2.msra.mxu0 %v176
  %1535 = vmatprep.subr.mxu0 0.0
  %1536 = vmatpush2.msra.mxu0 %v175
  %1537 = vmatprep.subr.mxu0 0.0
  %1538 = vmatpush2.msra.mxu0 %v174
  %1539 = vmatprep.subr.mxu0 0.0
  %1540 = vmatpush2.msra.mxu0 %v173
  %1541 = vmatprep.subr.mxu0 0.0
  %1542 = vmatpush2.msra.mxu0 %v172
  %1543 = vmatprep.subr.mxu0 0.0
  %1544 = vmatpush2.msra.mxu0 %v171
  %1545 = vmatprep.mubr.f32.mxu0 %v1030
  %1546 = vmatmul.mubr.f32.gmra.mxu0 %v998
  %v1547 = vpop.f32.mrf.mxu0
  %v1548 = vadd.f32 %v1403, %v1547
  %v1549 = vpop.f32.mrf.mxu0
  %1550 = vmatprep.mubr.f32.mxu0 %v1031
  %1551 = vmatmul.mubr.f32.gmra.mxu0 %v999
  %v1552 = vpop.f32.mrf.mxu0
  %v1553 = vadd.f32 %v1408, %v1552
  %v1554 = vpop.f32.mrf.mxu0
  %1555 = vmatprep.mubr.f32.mxu0 %v1032
  %1556 = vmatmul.mubr.f32.gmra.mxu0 %v1000
  %v1557 = vpop.f32.mrf.mxu0
  %v1558 = vadd.f32 %v1413, %v1557
  %v1559 = vpop.f32.mrf.mxu0
  %1560 = vmatprep.mubr.f32.mxu0 %v1033
  %1561 = vmatmul.mubr.f32.gmra.mxu0 %v1001
  %v1562 = vpop.f32.mrf.mxu0
  %v1563 = vadd.f32 %v1418, %v1562
  %v1564 = vpop.f32.mrf.mxu0
  %1565 = vmatprep.mubr.f32.mxu0 %v1034
  %1566 = vmatmul.mubr.f32.gmra.mxu0 %v1002
  %v1567 = vpop.f32.mrf.mxu0
  %v1568 = vadd.f32 %v1423, %v1567
  %v1569 = vpop.f32.mrf.mxu0
  %1570 = vmatprep.mubr.f32.mxu0 %v1035
  %1571 = vmatmul.mubr.f32.gmra.mxu0 %v1003
  %v1572 = vpop.f32.mrf.mxu0
  %v1573 = vadd.f32 %v1428, %v1572
  %v1574 = vpop.f32.mrf.mxu0
  %1575 = vmatprep.mubr.f32.mxu0 %v1036
  %1576 = vmatmul.mubr.f32.gmra.mxu0 %v1004
  %v1577 = vpop.f32.mrf.mxu0
  %v1578 = vadd.f32 %v1433, %v1577
  %v1579 = vpop.f32.mrf.mxu0
  %1580 = vmatprep.mubr.f32.mxu0 %v1037
  %1581 = vmatmul.mubr.f32.gmra.mxu0 %v1005
  %v1582 = vpop.f32.mrf.mxu0
  %v1583 = vadd.f32 %v1438, %v1582
  %v1584 = vpop.f32.mrf.mxu0
  %1585 = vmatprep.mubr.f32.mxu0 %v1038
  %1586 = vmatmul.mubr.f32.gmra.mxu0 %v1006
  %v1587 = vpop.f32.mrf.mxu0
  %v1588 = vadd.f32 %v1443, %v1587
  %v1589 = vpop.f32.mrf.mxu0
  %1590 = vmatprep.mubr.f32.mxu0 %v1039
  %1591 = vmatmul.mubr.f32.gmra.mxu0 %v1007
  %v1592 = vpop.f32.mrf.mxu0
  %v1593 = vadd.f32 %v1448, %v1592
  %v1594 = vpop.f32.mrf.mxu0
  %1595 = vmatprep.mubr.f32.mxu0 %v1040
  %1596 = vmatmul.mubr.f32.gmra.mxu0 %v1008
  %v1597 = vpop.f32.mrf.mxu0
  %v1598 = vadd.f32 %v1453, %v1597
  %v1599 = vpop.f32.mrf.mxu0
  %1600 = vmatprep.mubr.f32.mxu0 %v1041
  %1601 = vmatmul.mubr.f32.gmra.mxu0 %v1009
  %v1602 = vpop.f32.mrf.mxu0
  %v1603 = vadd.f32 %v1458, %v1602
  %v1604 = vpop.f32.mrf.mxu0
  %1605 = vmatprep.mubr.f32.mxu0 %v1042
  %1606 = vmatmul.mubr.f32.gmra.mxu0 %v1010
  %v1607 = vpop.f32.mrf.mxu0
  %v1608 = vadd.f32 %v1463, %v1607
  %v1609 = vpop.f32.mrf.mxu0
  %1610 = vmatprep.mubr.f32.mxu0 %v1043
  %1611 = vmatmul.mubr.f32.gmra.mxu0 %v1011
  %v1612 = vpop.f32.mrf.mxu0
  %v1613 = vadd.f32 %v1468, %v1612
  %v1614 = vpop.f32.mrf.mxu0
  %1615 = vmatprep.mubr.f32.mxu0 %v1044
  %1616 = vmatmul.mubr.f32.gmra.mxu0 %v1012
  %v1617 = vpop.f32.mrf.mxu0
  %v1618 = vadd.f32 %v1473, %v1617
  %v1619 = vpop.f32.mrf.mxu0
  %1620 = vmatprep.mubr.f32.mxu0 %v1045
  %1621 = vmatmul.mubr.f32.gmra.mxu0 %v1013
  %v1622 = vpop.f32.mrf.mxu0
  %v1623 = vadd.f32 %v1478, %v1622
  %v1624 = vpop.f32.mrf.mxu0
  %1625 = vdwg.mxu0
  %v1626 = vadd.f32 %v774, %v1548
  %v1627 = vadd.f32 %v775, %v1553
  %v1628 = vadd.f32 %v776, %v1558
  %v1629 = vadd.f32 %v777, %v1563
  %v1630 = vadd.f32 %v778, %v1568
  %v1631 = vadd.f32 %v779, %v1573
  %v1632 = vadd.f32 %v780, %v1578
  %v1633 = vadd.f32 %v781, %v1583
  %v1634 = vadd.f32 %v782, %v1588
  %v1635 = vadd.f32 %v783, %v1593
  %v1636 = vadd.f32 %v784, %v1598
  %v1637 = vadd.f32 %v785, %v1603
  %v1638 = vadd.f32 %v786, %v1608
  %v1639 = vadd.f32 %v787, %v1613
  %v1640 = vadd.f32 %v788, %v1618
  %v1641 = vadd.f32 %v789, %v1623
  %1642 = vst [vmem:[#allocation5] sm:$0xff] %v1626
  %1643 = vst [vmem:[#allocation5 + $0x8] sm:$0xff] %v1627
  %1644 = vst [vmem:[#allocation5 + $0x10] sm:$0xff] %v1628
  %1645 = vst [vmem:[#allocation5 + $0x18] sm:$0xff] %v1629
  %1646 = vst [vmem:[#allocation5 + $0x20] sm:$0xff] %v1630
  %1647 = vst [vmem:[#allocation5 + $0x28] sm:$0xff] %v1631
  %1648 = vst [vmem:[#allocation5 + $0x30] sm:$0xff] %v1632
  %1649 = vst [vmem:[#allocation5 + $0x38] sm:$0xff] %v1633
  %1650 = vst [vmem:[#allocation5 + $0x40] sm:$0xff] %v1634
  %1651 = vst [vmem:[#allocation5 + $0x48] sm:$0xff] %v1635
  %1652 = vst [vmem:[#allocation5 + $0x50] sm:$0xff] %v1636
  %1653 = vst [vmem:[#allocation5 + $0x58] sm:$0xff] %v1637
  %1654 = vst [vmem:[#allocation5 + $0x60] sm:$0xff] %v1638
  %1655 = vst [vmem:[#allocation5 + $0x68] sm:$0xff] %v1639
  %1656 = vst [vmem:[#allocation5 + $0x70] sm:$0xff] %v1640
  %1657 = vst [vmem:[#allocation5 + $0x78] sm:$0xff] %v1641
  // Predicated region
  $region22: #{vat_forward.1} parent=0 // pred_check
    %p1658 = pneg %p17
  $region23: #{vat_forward.1} parent=0 // pred_check_branch
    %1660 = sbr.rel (%p1658) target = $region25
  $region24: #{vat_forward.1} parent=0 // pred_region
    %v1661 = vld [vmem:[#allocation2] sm:$0xff]
    %v1662 = vld [vmem:[%s3] sm:$0x1]
    %v1664 = vlaneseq
    %v1665 = vshrl.u32 %v1664, 7
    %v1666 = vsub.s32 0, %v1665
    %v1667 = vrot.slane %v1662, %v1666
    %v1669 = vadd.f32 %v1661, %v1667
    %1670 = vmax.xlane.f32.xlu0 %v1669
    %v1671 = vpop.xlane.xlu0 %1670
    %v1672 = vsub.f32 %v1669, %v1671
    %v1673 = vmul.f32 %v1672, 1.442695
    %v1674 = vpow.pop %v1673
    %1675 = vadd.xlane.f32.xlu0 %v1674
    %v1676 = vpop.xlane.xlu0 %1675
    %v1677 = vlog2.pop %v1676
    %v1678 = vmul.f32 %v1677, 0.6931472
    %v1679 = vsub.f32 %v1672, %v1678
    %v1680 = vmul.f32 %v1679, 1.442695
    %v1681 = vpow.pop %v1680
    %v1682 = vld [vmem:[#allocation4] sm:$0xff]
    %v1683 = vrsqrt.pop %v1682
    %v1684 = vmul.f32 %v1682, %v1683
    %vm1685 = vcmp.eq.f32.partialorder %v1682, inf
    %v1686 = vsel %vm1685, %v1682, %v1684
    %vm1687 = vcmp.eq.f32.partialorder %v1682, 0.0
    %v1688 = vand.u32 %v1682, 2147483648
    %v1689 = vsel %vm1687, %v1688, %v1686
    %v1690 = vadd.f32 %v1689, 1e-08
    %v1691 = vrcp.pop %v1690
    %v1692 = vmul.f32 0.01, %v1691
    %v1693 = vld [vmem:[#allocation3] sm:$0xff]
    %1695 = vset.pattern.permute.xlu0 0
    %1696 = vperm.xlu0 %1695, %v1692
    %v1697 = vpop.permute.xlu0 %1696
    %v1699 = vmul.f32 %v1697, %v1693
    %v1700 = vadd.f32 %v1669, %v1699
    %1701 = vmax.xlane.f32.xlu0 %v1700
    %v1702 = vpop.xlane.xlu0 %1701
    %v1703 = vsub.f32 %v1700, %v1702
    %v1704 = vmul.f32 %v1703, 1.442695
    %v1705 = vpow.pop %v1704
    %1706 = vadd.xlane.f32.xlu0 %v1705
    %v1707 = vpop.xlane.xlu0 %1706
    %v1708 = vlog2.pop %v1707
    %v1709 = vmul.f32 %v1708, 0.6931472
    %v1710 = vsub.f32 %v1703, %v1709
    %v1711 = vmul.f32 %v1710, 1.442695
    %v1712 = vpow.pop %v1711
    %v1713 = vsub.f32 %v1712, %v1681
    %v1714 = vrcp.pop 2.0
    %v1715 = vmul.f32 %v1713, %v1714
    %v1716 = vld [vmem:[#allocation5] sm:$0xff]
    %v1717 = vld [vmem:[#allocation5 + $0x8] sm:$0xff]
    %v1718 = vld [vmem:[#allocation5 + $0x10] sm:$0xff]
    %v1719 = vld [vmem:[#allocation5 + $0x18] sm:$0xff]
    %v1720 = vld [vmem:[#allocation5 + $0x20] sm:$0xff]
    %v1721 = vld [vmem:[#allocation5 + $0x28] sm:$0xff]
    %v1722 = vld [vmem:[#allocation5 + $0x30] sm:$0xff]
    %v1723 = vld [vmem:[#allocation5 + $0x38] sm:$0xff]
    %v1724 = vld [vmem:[#allocation5 + $0x40] sm:$0xff]
    %v1725 = vld [vmem:[#allocation5 + $0x48] sm:$0xff]
    %v1726 = vld [vmem:[#allocation5 + $0x50] sm:$0xff]
    %v1727 = vld [vmem:[#allocation5 + $0x58] sm:$0xff]
    %v1728 = vld [vmem:[#allocation5 + $0x60] sm:$0xff]
    %v1729 = vld [vmem:[#allocation5 + $0x68] sm:$0xff]
    %v1730 = vld [vmem:[#allocation5 + $0x70] sm:$0xff]
    %v1731 = vld [vmem:[#allocation5 + $0x78] sm:$0xff]
    %1732 = vmatprep.subr.mxu0 0.0
    %1733 = vmatpush1.msra.mxu0 %v1731
    %1734 = vmatprep.subr.mxu0 0.0
    %1735 = vmatpush1.msra.mxu0 %v1730
    %1736 = vmatprep.subr.mxu0 0.0
    %1737 = vmatpush1.msra.mxu0 %v1729
    %1738 = vmatprep.subr.mxu0 0.0
    %1739 = vmatpush1.msra.mxu0 %v1728
    %1740 = vmatprep.subr.mxu0 0.0
    %1741 = vmatpush1.msra.mxu0 %v1727
    %1742 = vmatprep.subr.mxu0 0.0
    %1743 = vmatpush1.msra.mxu0 %v1726
    %1744 = vmatprep.subr.mxu0 0.0
    %1745 = vmatpush1.msra.mxu0 %v1725
    %1746 = vmatprep.subr.mxu0 0.0
    %1747 = vmatpush1.msra.mxu0 %v1724
    %1748 = vmatprep.subr.mxu0 0.0
    %1749 = vmatpush1.msra.mxu0 %v1723
    %1750 = vmatprep.subr.mxu0 0.0
    %1751 = vmatpush1.msra.mxu0 %v1722
    %1752 = vmatprep.subr.mxu0 0.0
    %1753 = vmatpush1.msra.mxu0 %v1721
    %1754 = vmatprep.subr.mxu0 0.0
    %1755 = vmatpush1.msra.mxu0 %v1720
    %1756 = vmatprep.subr.mxu0 0.0
    %1757 = vmatpush1.msra.mxu0 %v1719
    %1758 = vmatprep.subr.mxu0 0.0
    %1759 = vmatpush1.msra.mxu0 %v1718
    %1760 = vmatprep.subr.mxu0 0.0
    %1761 = vmatpush1.msra.mxu0 %v1717
    %1762 = vmatprep.subr.mxu0 0.0
    %1763 = vmatpush1.msra.mxu0 %v1716
    %1764 = vmatprep.subr.mxu0 0.0
    %1765 = vmatpush2.msra.mxu0 0.0
    %1766 = vmatprep.subr.mxu0 0.0
    %1767 = vmatpush2.msra.mxu0 0.0
    %1768 = vmatprep.subr.mxu0 0.0
    %1769 = vmatpush2.msra.mxu0 0.0
    %1770 = vmatprep.subr.mxu0 0.0
    %1771 = vmatpush2.msra.mxu0 0.0
    %1772 = vmatprep.subr.mxu0 0.0
    %1773 = vmatpush2.msra.mxu0 0.0
    %1774 = vmatprep.subr.mxu0 0.0
    %1775 = vmatpush2.msra.mxu0 0.0
    %1776 = vmatprep.subr.mxu0 0.0
    %1777 = vmatpush2.msra.mxu0 0.0
    %1778 = vmatprep.subr.mxu0 0.0
    %1779 = vmatpush2.msra.mxu0 0.0
    %1780 = vmatprep.subr.mxu0 0.0
    %1781 = vmatpush2.msra.mxu0 0.0
    %1782 = vmatprep.subr.mxu0 0.0
    %1783 = vmatpush2.msra.mxu0 0.0
    %1784 = vmatprep.subr.mxu0 0.0
    %1785 = vmatpush2.msra.mxu0 0.0
    %1786 = vmatprep.subr.mxu0 0.0
    %1787 = vmatpush2.msra.mxu0 0.0
    %1788 = vmatprep.subr.mxu0 0.0
    %1789 = vmatpush2.msra.mxu0 0.0
    %1790 = vmatprep.subr.mxu0 0.0
    %1791 = vmatpush2.msra.mxu0 0.0
    %1792 = vmatprep.subr.mxu0 0.0
    %1793 = vmatpush2.msra.mxu0 0.0
    %1794 = vmatprep.subr.mxu0 0.0
    %1795 = vmatpush2.msra.mxu0 0.0
    %1796 = vmatprep.mubr.f32.mxu0 0.0
    %1797 = vmatmul.mubr.f32.gmra.mxu0 %v1715
    %v1798 = vpop.f32.mrf.mxu0
    %v1799 = vadd.f32 0.0, %v1798
    %v1800 = vpop.f32.mrf.mxu0
    %1801 = vdwg.mxu0
    %v1802 = vmul.f32 %v1799, %v1715
    %1803 = vadd.xlane.f32.xlu0 %v1802
    %v1804 = vpop.xlane.xlu0 %1803
    %v1805 = vmax.f32 %v1804, 0.0
    %v1806 = vrsqrt.pop %v1805
    %v1807 = vmul.f32 %v1805, %v1806
    %vm1808 = vcmp.eq.f32.partialorder %v1805, inf
    %v1809 = vsel %vm1808, %v1805, %v1807
    %vm1810 = vcmp.eq.f32.partialorder %v1805, 0.0
    %v1811 = vand.u32 %v1805, 2147483648
    %v1812 = vsel %vm1810, %v1811, %v1809
    %v1813 = vadd.f32 %v1812, 1e-08
    %v1814 = vrcp.pop %v1813
    %v1815 = vmul.f32 1.0, %v1814
    %v1816 = vmul.f32 %v1815, %v1799
    %v1817 = vadd.f32 %v1669, %v1816
    %1818 = vmax.xlane.f32.xlu0 %v1817
    %v1819 = vpop.xlane.xlu0 %1818
    %v1820 = vsub.f32 %v1817, %v1819
    %v1821 = vmul.f32 %v1820, 1.442695
    %v1822 = vpow.pop %v1821
    %1823 = vadd.xlane.f32.xlu0 %v1822
    %v1824 = vpop.xlane.xlu0 %1823
    %v1825 = vlog2.pop %v1824
    %v1826 = vmul.f32 %v1825, 0.6931472
    %v1827 = vsub.f32 %v1820, %v1826
    %v1828 = vsub.f32 %v1679, %v1827
    %v1829 = vmul.f32 %v1681, %v1828
    %1830 = vadd.xlane.f32.xlu0 %v1829
    %v1831 = vpop.xlane.xlu0 %1830
    %1832 = vst [vmem:[%s4] sm:$0xff] %v1831
  $region25: #{vat_forward.1} parent=0 // pred_fallthru
    _
  // Predicated region
  $region26: #{vat_forward.1} parent=0 // pred_check
    _
  $region27: #{vat_forward.1} parent=0 // pred_check_branch
    %1834 = sbr.rel (0) target = $region29
  $region28: #{vat_forward.1} parent=0 // pred_region
    _
  $region29: #{vat_forward.1} parent=0 // pred_fallthru
    _
  // Predicated region
  $region30: #{vat_forward.1} parent=0 // pred_check
    _
  $region31: #{vat_forward.1} parent=0 // pred_check_branch
    %1836 = sbr.rel (0) target = $region33
  $region32: #{vat_forward.1} parent=0 // pred_region
    _
  $region33: #{vat_forward.1} parent=0 // pred_fallthru
    _

</llo_original>
